<compile_context>
chip_gen: v5e
topology: v5e:2x2
jax: 0.10.0
libtpu: 0.0.40
codegen_flags: <defaults>
</compile_context>

<pallas_src>
import math
from functools import partial

import jax
import jax.numpy as jnp
from jax.experimental import pallas as pl
from jax.experimental.pallas import tpu as pltpu


def _linear_attention_kernel(x_ref, wqkv_ref, wout_ref, bg_ref, mask_ref, o_ref, *,
                             heads, dim_head, batch_tile, seq_len, scale,
                             pack_pairs, mxu_dtype):
    hidden = heads * dim_head
    n = seq_len
    bt = batch_tile
    dim = o_ref.shape[0]

    # ---- to_qkv: Conv1d(dim, 3*hidden, 1, bias=False)  ==  W_qkv @ x -------------
    x = x_ref[...].astype(mxu_dtype)                                # (dim, bt*n)
    wqkv = wqkv_ref[...].astype(mxu_dtype)                          # (3*hidden, dim)
    qkv = jnp.dot(wqkv, x, preferred_element_type=jnp.float32)      # (3*hidden, bt*n) f32

    # ---- q softmax over the per-head channel axis d (batch-independent) ----------
    q3 = qkv[0:hidden, :].reshape(heads, dim_head, bt * n)
    q3 = jnp.exp(q3 - jnp.max(q3, axis=1, keepdims=True))
    q3 = q3 * pl.reciprocal(jnp.sum(q3, axis=1, keepdims=True), approx=False)
    q_full = (q3 * scale).reshape(hidden, bt * n).astype(mxu_dtype)

    # ---- resident parameters ------------------------------------------------------
    mask = mask_ref[...]                                            # f32 0/1 block-diag
    wout = wout_ref[...].astype(mxu_dtype)                          # (dim, hidden)
    bg = bg_ref[...].astype(jnp.float32)                            # (dim, 2) = [bias | g]
    bias = bg[:, 0:1]
    gscale = bg[:, 1:2] * (dim ** 0.5)

    def k_softmax(k_f32):
        # k softmax over the sequence axis, f32 math; divide moved onto the EUP.
        e = jnp.exp(k_f32 - jnp.max(k_f32, axis=-1, keepdims=True))
        r = pl.reciprocal(jnp.sum(e, axis=-1, keepdims=True), approx=False)
        return (e * r).astype(mxu_dtype)

    def attend_and_store(ctx_blk, col):
        # out = ctx @ q  -> to_out projection + bias -> RMSNorm -> direct store.
        sl = slice(col, col + n)
        out = jnp.dot(ctx_blk, q_full[:, sl],
                      preferred_element_type=jnp.float32).astype(mxu_dtype)   # (hidden, n)
        proj = jnp.dot(wout, out, preferred_element_type=jnp.float32) + bias  # (dim, n) f32
        inv_norm = jax.lax.rsqrt(
            jnp.maximum(jnp.sum(proj * proj, axis=0, keepdims=True), 1e-24))  # EUP rsqrt
        o_ref[:, sl] = (proj * inv_norm * gscale).astype(o_ref.dtype)

    if pack_pairs:
        # 256-row packed context matmul: two batch elements per MXU output tile.
        for p in range(bt // 2):
            c0, c1 = (2 * p) * n, (2 * p + 1) * n
            k2 = jnp.concatenate(
                [k_softmax(qkv[hidden:2 * hidden, c0:c0 + n]),
                 k_softmax(qkv[hidden:2 * hidden, c1:c1 + n])], axis=0)       # (2h, n)
            v2 = jnp.concatenate(
                [qkv[2 * hidden:3 * hidden, c0:c0 + n],
                 qkv[2 * hidden:3 * hidden, c1:c1 + n]], axis=0).astype(mxu_dtype)
            # ctx[e, d] = sum_n v[e, n] * k[d, n], masked to (batch, head) diag blocks.
            ctx = jax.lax.dot_general(v2, k2, (((1,), (1,)), ((), ())),
                                      preferred_element_type=jnp.float32)     # (2h, 2h)
            ctx = (ctx * mask).astype(mxu_dtype)
            attend_and_store(ctx[0:hidden, 0:hidden], c0)
            attend_and_store(ctx[hidden:2 * hidden, hidden:2 * hidden], c1)
    else:
        for b in range(bt):
            c0 = b * n
            k1 = k_softmax(qkv[hidden:2 * hidden, c0:c0 + n])                 # (h, n)
            v1 = qkv[2 * hidden:3 * hidden, c0:c0 + n].astype(mxu_dtype)      # (h, n)
            ctx = jax.lax.dot_general(v1, k1, (((1,), (1,)), ((), ())),
                                      preferred_element_type=jnp.float32)     # (h, h)
            ctx = (ctx * mask).astype(mxu_dtype)
            attend_and_store(ctx, c0)


def _device_kind():
    try:
        return jax.devices()[0].device_kind.lower()
    except Exception:
        return ""


def _chip_config():
    kind = _device_kind()
    if "v5" in kind or "v6" in kind:
        # Single TensorCore, 128 MiB physical VMEM: one fat grid step when it fits.
        return dict(keep_two_steps=False, vmem_budget=72 << 20,
                    vmem_limit=96 << 20, pack_pairs="v5" not in kind)
    # v7x (2 TCs, 64 MiB VMEM) and unknown parts: conservative budget, keep the grid
    # wide enough for both TensorCores.
    return dict(keep_two_steps=True, vmem_budget=36 << 20,
                vmem_limit=48 << 20, pack_pairs=True)


def _vmem_estimate_bytes(bt, n, dim, hidden, in_bytes):
    cols = bt * n
    io = 2 * 2 * dim * cols * in_bytes            # double-buffered x / out slabs
    qkv_f32 = 3 * hidden * cols * 4               # projected qkv (f32 accumulation)
    q_tmp = 2 * hidden * cols * 4                 # q softmax temporaries + MXU-dtype copy
    weights = 2 * (3 * hidden * 128 + 2 * 128 * hidden) * max(in_bytes, 4)
    mask = 2 * (2 * hidden) * (2 * hidden) * 4
    per_iter = 8 * hidden * n * 4                 # k/v/ctx/out temporaries of one step
    return io + qkv_f32 + q_tmp + weights + mask + per_iter + (2 << 20)


def _pick_batch_tile(b, n, dim, hidden, in_bytes, *, keep_two_steps, vmem_budget):
    """Largest batch tile whose residency fits the chip's VMEM budget.  Single-TC
    chips prefer one fat grid step; v7x keeps >= 2 'parallel' steps for its 2 TCs."""
    for cand in range(b, 0, -1):
        if b % cand:
            continue
        if cand != b and (cand * n) % 128 != 0:
            continue                                  # partial tiles must stay lane-aligned
        if keep_two_steps and b > 1 and b // cand < 2:
            continue                                  # leave work for the second TensorCore
        if _vmem_estimate_bytes(cand, n, dim, hidden, in_bytes) > vmem_budget:
            continue
        return cand
    return 1


def linear_attention_pallas(x, w_qkv, w_out, b_out, g, *, heads, dim_head,
                            batch_tile=None, mxu_dtype=None, pack_context_pairs=None):
    b, dim, n = x.shape
    hidden = heads * dim_head
    scale = dim_head ** (-0.5)
    cfg = _chip_config()

    if mxu_dtype is None:
        mxu_dtype = x.dtype       # native dtype; pass jnp.bfloat16 to force the fast MXU path
    if pack_context_pairs is None:
        pack_context_pairs = cfg["pack_pairs"]

    in_bytes = jnp.dtype(x.dtype).itemsize
    if batch_tile is None:
        bt = _pick_batch_tile(b, n, dim, hidden, in_bytes,
                              keep_two_steps=cfg["keep_two_steps"],
                              vmem_budget=cfg["vmem_budget"])
    else:
        bt = batch_tile
    assert b % bt == 0, "batch must be divisible by the batch tile"
    assert (bt == b) or (n % 128 == 0), "partial batch tiles need lane-aligned n"

    pack_used = bool(pack_context_pairs) and bt >= 2 and bt % 2 == 0
    mrows = 2 * hidden if pack_used else hidden

    # Layout plumbing (outside the kernel): channels on sublanes, (batch, seq) flattened
    # into one lane-dense axis; conv bias + RMSNorm gain fused into one (dim, 2) tile;
    # (batch, head) block-diagonal 0/1 mask built once and kept resident.
    x2d = jnp.transpose(x, (1, 0, 2)).reshape(dim, b * n)
    bg = jnp.concatenate([b_out.reshape(dim, 1), g.reshape(dim, 1)], axis=1)   # (dim, 2)
    ids = jnp.arange(mrows, dtype=jnp.int32) // dim_head
    head_mask = (ids[:, None] == ids[None, :]).astype(jnp.float32)             # (mrows, mrows)

    kernel = partial(_linear_attention_kernel, heads=heads, dim_head=dim_head,
                     batch_tile=bt, seq_len=n, scale=scale,
                     pack_pairs=pack_used, mxu_dtype=mxu_dtype)

    out2d = pl.pallas_call(
        kernel,
        out_shape=jax.ShapeDtypeStruct((dim, b * n), x.dtype),
        grid_spec=pltpu.PrefetchScalarGridSpec(
            num_scalar_prefetch=0,
            grid=(b // bt,),
            in_specs=[
                pl.BlockSpec((dim, bt * n), lambda i: (0, i)),        # x slab
                pl.BlockSpec((3 * hidden, dim), lambda i: (0, 0)),    # w_qkv (resident)
                pl.BlockSpec((dim, hidden), lambda i: (0, 0)),        # w_out (resident)
                pl.BlockSpec((dim, 2), lambda i: (0, 0)),             # [bias | g]
                pl.BlockSpec((mrows, mrows), lambda i: (0, 0)),       # block-diag mask
            ],
            out_specs=pl.BlockSpec((dim, bt * n), lambda i: (0, i)),  # lane-dense output
        ),
        compiler_params=pltpu.CompilerParams(
            dimension_semantics=("parallel",),
            vmem_limit_bytes=cfg["vmem_limit"]),
    )(x2d, w_qkv, w_out, bg, head_mask)

    return out2d.reshape(dim, b, n).transpose(1, 0, 2)


def linear_attention_ref(x, w_qkv, w_out, b_out, g, *, heads, dim_head):
    """Pure-JAX reference mirroring the PyTorch forward."""
    b, dim, n = x.shape
    hidden = heads * dim_head
    scale = dim_head ** (-0.5)
    qkv = jnp.einsum('oc,bcn->bon', w_qkv, x)
    q, k, v = jnp.split(qkv, 3, axis=1)
    rs = lambda t: t.reshape(b, heads, dim_head, n)
    q, k, v = rs(q), rs(k), rs(v)
    q = jax.nn.softmax(q, axis=-2) * scale
    k = jax.nn.softmax(k, axis=-1)
    context = jnp.einsum('bhdn,bhen->bhde', k, v)
    out = jnp.einsum('bhde,bhdn->bhen', context, q).reshape(b, hidden, n)
    proj = jnp.einsum('oc,bcn->bon', w_out, out) + b_out[None]
    l2 = jnp.sqrt(jnp.sum(proj * proj, axis=1, keepdims=True))
    normed = proj / jnp.maximum(l2, 1e-12)
    return normed * g[None] * (dim ** 0.5)


if __name__ == "__main__":
    # Shapes consistent with LinearAttention(dim=32, heads=4, dim_head=32).
    HEADS, DIM_HEAD = 4, 32
    HIDDEN = HEADS * DIM_HEAD
    DIM, N = 32, 128

    key = jax.random.PRNGKey(0)
    kx, kq, ko, kb, _ = jax.random.split(key, 5)

    # Deterministic synthetic parameters (Conv1d k=1 weights squeezed to 2-D).
    w_qkv = jax.random.normal(kq, (3 * HIDDEN, DIM), jnp.float32) * (1.0 / math.sqrt(DIM))
    w_out = jax.random.normal(ko, (DIM, HIDDEN), jnp.float32) * (1.0 / math.sqrt(HIDDEN))
    b_out = jax.random.normal(kb, (DIM, 1), jnp.float32) * 0.01
    g = jnp.ones((DIM, 1), jnp.float32)   # RMSNorm.g initialized to ones

    # f32 correctness: exercise the 256-row packed-context path, the per-batch path,
    # and the auto (chip-derived) configuration.
    for B, pack in ((4, True), (4, False), (2, None)):
        x = jax.random.normal(jax.random.fold_in(kx, B), (B, DIM, N), jnp.float32)
        out = jax.block_until_ready(
            linear_attention_pallas(x, w_qkv, w_out, b_out, g, heads=HEADS,
                                    dim_head=DIM_HEAD, pack_context_pairs=pack))
        ref = linear_attention_ref(x, w_qkv, w_out, b_out, g,
                                   heads=HEADS, dim_head=DIM_HEAD)
        assert out.shape == (B, DIM, N)
        assert jnp.allclose(out, ref, atol=1e-4, rtol=1e-4), \
            f"mismatch vs reference (B={B}, pack={pack})"

    # bf16-MXU flag on f32 inputs (bf16 operands, f32 accumulation) — loose tolerance.
    xf = jax.random.normal(jax.random.fold_in(kx, 7), (4, DIM, N), jnp.float32)
    ref_f = linear_attention_ref(xf, w_qkv, w_out, b_out, g, heads=HEADS, dim_head=DIM_HEAD)
    out_bfm = jax.block_until_ready(
        linear_attention_pallas(xf, w_qkv, w_out, b_out, g, heads=HEADS,
                                dim_head=DIM_HEAD, mxu_dtype=jnp.bfloat16))
    assert jnp.allclose(out_bfm, ref_f, atol=1e-1, rtol=1e-1), "bf16-MXU flag mismatch"

    # Native-bf16 model path, checked against the f32 reference at bf16 tolerance.
    to_bf = lambda t: t.astype(jnp.bfloat16)
    xb = to_bf(xf)
    ob = jax.block_until_ready(
        linear_attention_pallas(xb, to_bf(w_qkv), to_bf(w_out), to_bf(b_out), to_bf(g),
                                heads=HEADS, dim_head=DIM_HEAD))
    ref_b = linear_attention_ref(xb.astype(jnp.float32), w_qkv, w_out, b_out, g,
                                 heads=HEADS, dim_head=DIM_HEAD)
    assert ob.shape == (4, DIM, N) and ob.dtype == jnp.bfloat16
    assert bool(jnp.all(jnp.isfinite(ob.astype(jnp.float32))))
    assert jnp.allclose(ob.astype(jnp.float32), ref_b, atol=1.5e-1, rtol=1.5e-1), \
        "bf16 model path mismatch vs f32 reference"

    print("KERNEL_OK")
</pallas_src>

<mosaic_0001>
module attributes {stable_mosaic.version = 11 : i64} {
  func.func @_linear_attention_kernel(%arg0: i32, %arg1: memref<32x256xf32, #tpu.memory_space<vmem>>, %arg2: memref<384x32xf32, #tpu.memory_space<vmem>>, %arg3: memref<32x128xf32, #tpu.memory_space<vmem>>, %arg4: memref<32x2xf32, #tpu.memory_space<vmem>>, %arg5: memref<256x256xf32, #tpu.memory_space<vmem>>, %arg6: memref<32x256xf32, #tpu.memory_space<vmem>>) attributes {dimension_semantics = [#tpu.dimension_semantics<parallel>], iteration_bounds = array<i64: 2>, scalar_prefetch = 0 : i64, scratch_operands = 0 : i64, tpu.core_type = #tpu.core_type<tc>, window_params = [{transform_indices = @transform_0, window_bounds = array<i64: 32, 256>}, {pipeline_mode = #tpu.pipeline_mode<synchronous>, transform_indices = @transform_1, window_bounds = array<i64: 384, 32>}, {pipeline_mode = #tpu.pipeline_mode<synchronous>, transform_indices = @transform_2, window_bounds = array<i64: 32, 128>}, {pipeline_mode = #tpu.pipeline_mode<synchronous>, transform_indices = @transform_3, window_bounds = array<i64: 32, 2>}, {pipeline_mode = #tpu.pipeline_mode<synchronous>, transform_indices = @transform_4, window_bounds = array<i64: 256, 256>}, {transform_indices = @transform_5, window_bounds = array<i64: 32, 256>}]} {
    %c0 = arith.constant 0 : index
    %c0_0 = arith.constant 0 : index
    %0 = vector.load %arg1[%c0, %c0_0] : memref<32x256xf32, #tpu.memory_space<vmem>>, vector<32x256xf32>
    %c0_1 = arith.constant 0 : index
    %c0_2 = arith.constant 0 : index
    %1 = vector.load %arg2[%c0_1, %c0_2] : memref<384x32xf32, #tpu.memory_space<vmem>>, vector<384x32xf32>
    %cst = arith.constant dense<0.000000e+00> : vector<384x256xf32>
    %2 = tpu.matmul %1, %0, %cst {dimension_numbers = #tpu.dot_dimension_numbers<[1], [0], [0], [1], [0, 0, 1, 1], [], []>} : vector<384x32xf32>, vector<32x256xf32>, vector<384x256xf32> -> vector<384x256xf32>
    %3 = vector.extract_strided_slice %2 {offsets = [0, 0], sizes = [128, 256], strides = [1, 1]} : vector<384x256xf32> to vector<128x256xf32>
    %4 = vector.shape_cast %3 : vector<128x256xf32> to vector<4x32x256xf32>
    %cst_3 = arith.constant dense<0xFF800000> : vector<4x256xf32>
    %5 = vector.multi_reduction <maximumf>, %4, %cst_3 [1] : vector<4x32x256xf32> to vector<4x256xf32>
    %6 = vector.shape_cast %5 : vector<4x256xf32> to vector<4x1x256xf32>
    %7 = vector.broadcast %6 : vector<4x1x256xf32> to vector<4x32x256xf32>
    %8 = arith.subf %4, %7 : vector<4x32x256xf32>
    %9 = math.exp %8 : vector<4x32x256xf32>
    %cst_4 = arith.constant dense<0.000000e+00> : vector<4x256xf32>
    %10 = vector.multi_reduction <add>, %9, %cst_4 [1] : vector<4x32x256xf32> to vector<4x256xf32>
    %11 = vector.shape_cast %10 : vector<4x256xf32> to vector<4x1x256xf32>
    %12 = tpu.reciprocal %11 : vector<4x1x256xf32> -> vector<4x1x256xf32>
    %13 = vector.broadcast %12 : vector<4x1x256xf32> to vector<4x32x256xf32>
    %14 = arith.mulf %9, %13 : vector<4x32x256xf32>
    %cst_5 = arith.constant 0.176776692 : f32
    %15 = vector.broadcast %cst_5 : f32 to vector<4x32x256xf32>
    %16 = arith.mulf %14, %15 : vector<4x32x256xf32>
    %17 = vector.shape_cast %16 : vector<4x32x256xf32> to vector<128x256xf32>
    %c0_6 = arith.constant 0 : index
    %c0_7 = arith.constant 0 : index
    %18 = vector.load %arg5[%c0_6, %c0_7] : memref<256x256xf32, #tpu.memory_space<vmem>>, vector<256x256xf32>
    %c0_8 = arith.constant 0 : index
    %c0_9 = arith.constant 0 : index
    %19 = vector.load %arg3[%c0_8, %c0_9] : memref<32x128xf32, #tpu.memory_space<vmem>>, vector<32x128xf32>
    %c0_10 = arith.constant 0 : index
    %c0_11 = arith.constant 0 : index
    %20 = vector.load %arg4[%c0_10, %c0_11] : memref<32x2xf32, #tpu.memory_space<vmem>>, vector<32x2xf32>
    %21 = vector.extract_strided_slice %20 {offsets = [0, 0], sizes = [32, 1], strides = [1, 1]} : vector<32x2xf32> to vector<32x1xf32>
    %22 = vector.extract_strided_slice %20 {offsets = [0, 1], sizes = [32, 1], strides = [1, 1]} : vector<32x2xf32> to vector<32x1xf32>
    %cst_12 = arith.constant 5.65685415 : f32
    %23 = vector.broadcast %cst_12 : f32 to vector<32x1xf32>
    %24 = arith.mulf %22, %23 : vector<32x1xf32>
    %25 = vector.extract_strided_slice %2 {offsets = [128, 0], sizes = [128, 128], strides = [1, 1]} : vector<384x256xf32> to vector<128x128xf32>
    %cst_13 = arith.constant dense<0xFF800000> : vector<128xf32>
    %26 = vector.multi_reduction <maximumf>, %25, %cst_13 [1] : vector<128x128xf32> to vector<128xf32>
    %27 = vector.shape_cast %26 : vector<128xf32> to vector<128x1xf32>
    %28 = vector.broadcast %27 : vector<128x1xf32> to vector<128x128xf32>
    %29 = arith.subf %25, %28 : vector<128x128xf32>
    %30 = math.exp %29 : vector<128x128xf32>
    %cst_14 = arith.constant dense<0.000000e+00> : vector<128xf32>
    %31 = vector.multi_reduction <add>, %30, %cst_14 [1] : vector<128x128xf32> to vector<128xf32>
    %32 = vector.shape_cast %31 : vector<128xf32> to vector<128x1xf32>
    %33 = tpu.reciprocal %32 : vector<128x1xf32> -> vector<128x1xf32>
    %34 = vector.broadcast %33 : vector<128x1xf32> to vector<128x128xf32>
    %35 = arith.mulf %30, %34 : vector<128x128xf32>
    %36 = vector.extract_strided_slice %2 {offsets = [128, 128], sizes = [128, 128], strides = [1, 1]} : vector<384x256xf32> to vector<128x128xf32>
    %cst_15 = arith.constant dense<0xFF800000> : vector<128xf32>
    %37 = vector.multi_reduction <maximumf>, %36, %cst_15 [1] : vector<128x128xf32> to vector<128xf32>
    %38 = vector.shape_cast %37 : vector<128xf32> to vector<128x1xf32>
    %39 = vector.broadcast %38 : vector<128x1xf32> to vector<128x128xf32>
    %40 = arith.subf %36, %39 : vector<128x128xf32>
    %41 = math.exp %40 : vector<128x128xf32>
    %cst_16 = arith.constant dense<0.000000e+00> : vector<128xf32>
    %42 = vector.multi_reduction <add>, %41, %cst_16 [1] : vector<128x128xf32> to vector<128xf32>
    %43 = vector.shape_cast %42 : vector<128xf32> to vector<128x1xf32>
    %44 = tpu.reciprocal %43 : vector<128x1xf32> -> vector<128x1xf32>
    %45 = vector.broadcast %44 : vector<128x1xf32> to vector<128x128xf32>
    %46 = arith.mulf %41, %45 : vector<128x128xf32>
    %47 = tpu.concatenate %35, %46 in 0 : vector<128x128xf32>, vector<128x128xf32> -> vector<256x128xf32>
    %48 = vector.extract_strided_slice %2 {offsets = [256, 0], sizes = [128, 128], strides = [1, 1]} : vector<384x256xf32> to vector<128x128xf32>
    %49 = vector.extract_strided_slice %2 {offsets = [256, 128], sizes = [128, 128], strides = [1, 1]} : vector<384x256xf32> to vector<128x128xf32>
    %50 = tpu.concatenate %48, %49 in 0 : vector<128x128xf32>, vector<128x128xf32> -> vector<256x128xf32>
    %cst_17 = arith.constant dense<0.000000e+00> : vector<256x256xf32>
    %51 = tpu.matmul %50, %47, %cst_17 {dimension_numbers = #tpu.dot_dimension_numbers<[1], [1], [0], [0], [0, 0, 1, 0], [], []>} : vector<256x128xf32>, vector<256x128xf32>, vector<256x256xf32> -> vector<256x256xf32>
    %52 = arith.mulf %51, %18 : vector<256x256xf32>
    %53 = vector.extract_strided_slice %52 {offsets = [0, 0], sizes = [128, 128], strides = [1, 1]} : vector<256x256xf32> to vector<128x128xf32>
    %54 = vector.extract_strided_slice %17 {offsets = [0, 0], sizes = [128, 128], strides = [1, 1]} : vector<128x256xf32> to vector<128x128xf32>
    %cst_18 = arith.constant dense<0.000000e+00> : vector<128x128xf32>
    %55 = tpu.matmul %53, %54, %cst_18 {dimension_numbers = #tpu.dot_dimension_numbers<[1], [0], [0], [1], [0, 0, 1, 1], [], []>} : vector<128x128xf32>, vector<128x128xf32>, vector<128x128xf32> -> vector<128x128xf32>
    %cst_19 = arith.constant dense<0.000000e+00> : vector<32x128xf32>
    %56 = tpu.matmul %19, %55, %cst_19 {dimension_numbers = #tpu.dot_dimension_numbers<[1], [0], [0], [1], [0, 0, 1, 1], [], []>} : vector<32x128xf32>, vector<128x128xf32>, vector<32x128xf32> -> vector<32x128xf32>
    %57 = vector.broadcast %21 : vector<32x1xf32> to vector<32x128xf32>
    %58 = arith.addf %56, %57 : vector<32x128xf32>
    %59 = arith.mulf %58, %58 : vector<32x128xf32>
    %cst_20 = arith.constant dense<0.000000e+00> : vector<128xf32>
    %60 = vector.multi_reduction <add>, %59, %cst_20 [0] : vector<32x128xf32> to vector<128xf32>
    %61 = vector.shape_cast %60 : vector<128xf32> to vector<1x128xf32>
    %cst_21 = arith.constant 1.000000e-24 : f32
    %62 = vector.broadcast %cst_21 : f32 to vector<1x128xf32>
    %63 = arith.maximumf %61, %62 : vector<1x128xf32>
    %64 = math.rsqrt %63 : vector<1x128xf32>
    %65 = vector.broadcast %64 : vector<1x128xf32> to vector<32x128xf32>
    %66 = arith.mulf %58, %65 : vector<32x128xf32>
    %67 = vector.broadcast %24 : vector<32x1xf32> to vector<32x128xf32>
    %68 = arith.mulf %66, %67 : vector<32x128xf32>
    %c0_22 = arith.constant 0 : index
    %c0_23 = arith.constant 0 : index
    %69 = vector.load %arg6[%c0_22, %c0_23] : memref<32x256xf32, #tpu.memory_space<vmem>>, vector<32x128xf32>
    tpu.vector_store %arg6[%c0_22, %c0_23], %68 {strides = array<i32>} : memref<32x256xf32, #tpu.memory_space<vmem>>, vector<32x128xf32>,
    %70 = vector.extract_strided_slice %52 {offsets = [128, 128], sizes = [128, 128], strides = [1, 1]} : vector<256x256xf32> to vector<128x128xf32>
    %71 = vector.extract_strided_slice %17 {offsets = [0, 128], sizes = [128, 128], strides = [1, 1]} : vector<128x256xf32> to vector<128x128xf32>
    %cst_24 = arith.constant dense<0.000000e+00> : vector<128x128xf32>
    %72 = tpu.matmul %70, %71, %cst_24 {dimension_numbers = #tpu.dot_dimension_numbers<[1], [0], [0], [1], [0, 0, 1, 1], [], []>} : vector<128x128xf32>, vector<128x128xf32>, vector<128x128xf32> -> vector<128x128xf32>
    %cst_25 = arith.constant dense<0.000000e+00> : vector<32x128xf32>
    %73 = tpu.matmul %19, %72, %cst_25 {dimension_numbers = #tpu.dot_dimension_numbers<[1], [0], [0], [1], [0, 0, 1, 1], [], []>} : vector<32x128xf32>, vector<128x128xf32>, vector<32x128xf32> -> vector<32x128xf32>
    %74 = vector.broadcast %21 : vector<32x1xf32> to vector<32x128xf32>
    %75 = arith.addf %73, %74 : vector<32x128xf32>
    %76 = arith.mulf %75, %75 : vector<32x128xf32>
    %cst_26 = arith.constant dense<0.000000e+00> : vector<128xf32>
    %77 = vector.multi_reduction <add>, %76, %cst_26 [0] : vector<32x128xf32> to vector<128xf32>
    %78 = vector.shape_cast %77 : vector<128xf32> to vector<1x128xf32>
    %cst_27 = arith.constant 1.000000e-24 : f32
    %79 = vector.broadcast %cst_27 : f32 to vector<1x128xf32>
    %80 = arith.maximumf %78, %79 : vector<1x128xf32>
    %81 = math.rsqrt %80 : vector<1x128xf32>
    %82 = vector.broadcast %81 : vector<1x128xf32> to vector<32x128xf32>
    %83 = arith.mulf %75, %82 : vector<32x128xf32>
    %84 = vector.broadcast %24 : vector<32x1xf32> to vector<32x128xf32>
    %85 = arith.mulf %83, %84 : vector<32x128xf32>
    %c0_28 = arith.constant 0 : index
    %c128 = arith.constant 128 : index
    %86 = vector.load %arg6[%c0_28, %c128] : memref<32x256xf32, #tpu.memory_space<vmem>>, vector<32x128xf32>
    tpu.vector_store %arg6[%c0_28, %c128], %85 {strides = array<i32>} : memref<32x256xf32, #tpu.memory_space<vmem>>, vector<32x128xf32>,
    return
  }
  func.func @transform_0(%arg0: i32) -> (i32, i32) {
    %c0_i32 = arith.constant 0 : i32
    %c0_i32_0 = arith.constant 0 : i32
    return %c0_i32, %arg0 : i32, i32
  }
  func.func @transform_1(%arg0: i32) -> (i32, i32) {
    %c0_i32 = arith.constant 0 : i32
    %c0_i32_0 = arith.constant 0 : i32
    %c0_i32_1 = arith.constant 0 : i32
    return %c0_i32, %c0_i32_0 : i32, i32
  }
  func.func @transform_2(%arg0: i32) -> (i32, i32) {
    %c0_i32 = arith.constant 0 : i32
    %c0_i32_0 = arith.constant 0 : i32
    %c0_i32_1 = arith.constant 0 : i32
    return %c0_i32, %c0_i32_0 : i32, i32
  }
  func.func @transform_3(%arg0: i32) -> (i32, i32) {
    %c0_i32 = arith.constant 0 : i32
    %c0_i32_0 = arith.constant 0 : i32
    %c0_i32_1 = arith.constant 0 : i32
    return %c0_i32, %c0_i32_0 : i32, i32
  }
  func.func @transform_4(%arg0: i32) -> (i32, i32) {
    %c0_i32 = arith.constant 0 : i32
    %c0_i32_0 = arith.constant 0 : i32
    %c0_i32_1 = arith.constant 0 : i32
    return %c0_i32, %c0_i32_0 : i32, i32
  }
  func.func @transform_5(%arg0: i32) -> (i32, i32) {
    %c0_i32 = arith.constant 0 : i32
    %c0_i32_0 = arith.constant 0 : i32
    return %c0_i32, %arg0 : i32, i32
  }
}

</mosaic_0001>

<llo_original>
// kernel: tpu_custom_call.1
$region0: #{tpu_custom_call.1}
  #allocation0 [shape = 'u32[]', space=smem, size = 0x4, offset = 0x4, fixed_abs, tag = 'smem constant byte address 0x4 - core index']
  #allocation1 [shape = 'u32[72,128]{1,0:T(1,128)}', space=vmem, size = 0x9000, scoped, tag = 'internal scratch']
  %s0 = inlined_call_operand.hbm [shape: f32[32,512], index: 0, kind: input, shape index: {}]
  %s1 = inlined_call_operand.vmem [shape: f32[384,32], index: 1, kind: input, shape index: {}]
  %s2 = inlined_call_operand.hbm [shape: f32[32,128], index: 2, kind: input, shape index: {}]
  %s3 = inlined_call_operand.vmem [shape: f32[32,2], index: 3, kind: input, shape index: {}]
  %s4 = inlined_call_operand.vmem [shape: f32[256,256], index: 4, kind: input, shape index: {}]
  %s5 = inlined_call_operand.hbm [shape: f32[32,512], index: 5, kind: output, shape index: {}]
  %s6 = sld [smem:[#allocation0]]
  $region61: #{tpu_custom_call.1} parent=0
    _
  %s8 = ssub.s32 1, %s6
  %s9 = scalar_select 0, %s8, %s6
  $region1: #{tpu_custom_call.1} parent=0
    #allocation2 [shape = 'u8[65536]{0}', space=vmem, size = 0x10000, scoped, tag = 'input window, operand 0']
    #allocation3 [shape = 's32[2]{0}', space=sflag, size = 0x8, scoped, tag = 'scoped memory for tpu_custom_call.1']
    #allocation4 [shape = 's32[2]{0}', space=sflag, size = 0x8, scoped, tag = 'scoped memory for tpu_custom_call.1']
    #allocation5 [shape = 'u8[16384]{0}', space=vmem, size = 0x4000, scoped, tag = 'input window, operand 2, single buffered']
    #allocation6 [shape = 's32[1]{0}', space=sflag, size = 0x4, scoped, tag = 'scoped memory for tpu_custom_call.1']
    #allocation7 [shape = 'u8[65536]{0}', space=vmem, size = 0x10000, scoped, tag = 'output window, operand 0']
    %10 = vsyncpa [#allocation3], 0
    %s11 = scalar_lea.sflag [#allocation3], 1
    %12 = vsyncpa %s11, 0
    %13 = vsyncpa [#allocation6], 0
    %14 = vsyncpa [#allocation4], 0
    %s15 = scalar_lea.sflag [#allocation4], 1
    %16 = vsyncpa %s15, 0
    loop: start=0, step=1, limit=4
    $region2: #{tpu_custom_call.1} parent=1 // loop_pre_header
      _
    $region3: #{tpu_custom_call.1} parent=1 // loop_header
      %s18 = sphi 0, %s22
      %p19 = scmp.ge.s32.totalorder %s18, 4
      %s28 = sphi 0, %s30
      %s31 = sphi 0, %s28
      %s32 = sphi 0, %s31
      %s48 = sphi 0, %s32
      %s52 = sphi 0, %s52
      %s54 = sphi 0, %s52
      %s55 = sphi 0, %s54
      %s69 = sphi 0, %s55
      %s73 = sphi 0, %s73
      %s75 = sphi 0, %s73
      %s76 = sphi 0, %s75
      %s90 = sphi 0, %s76
      %s94 = sphi 0, %s94
      %s96 = sphi 0, %s94
      %s97 = sphi 0, %s96
      %s111 = sphi 0, %s97
      %s115 = sphi 0, %s115
      %s117 = sphi 0, %s115
      %s118 = sphi 0, %s117
      %s132 = sphi 0, %s118
      %s138 = sphi 0, %s140
      %s141 = sphi 0, %s138
      %s142 = sphi 0, %s141
      %s158 = sphi 0, %s142
    $region4: #{tpu_custom_call.1} parent=1 // loop_header_branch
      %21 = sbr.rel (%p19) target = $region8
    $region5: #{tpu_custom_call.1} parent=1 // loop_body
      %s23 = ssub.s32 %s18, 1
      %s24 = ssub.s32 %s18, 2
      %s25 = sadd.s32 %s18, 1
      %s26 = ssub.s32 %s18, %s25
      %p27 = scmp.eq.s32.totalorder %s26, 0
      %s29 = sadd.s32 %s28, 1
      %s30 = scalar_select %p27, %s28, %s29
      %p33 = pneg %p27
      %p34 = scmp.eq.s32.totalorder %s18, 1
      %p35 = por %p33, %p34
      %p36 = scmp.ne.s32.totalorder %s28, %s31
      %p37 = scmp.eq.s32.totalorder %s18, 0
      %p38 = por %p36, %p37
      %p39 = scmp.ne.s32.totalorder %s28, %s31
      %p40 = scmp.eq.s32.totalorder %s23, 1
      %p41 = por %p39, %p40
      %p42 = scmp.ne.s32.totalorder %s31, %s32
      %p43 = scmp.eq.s32.totalorder %s23, 0
      %p44 = por %p42, %p43
      %p45 = scmp.ne.s32.totalorder %s31, %s32
      %p46 = scmp.eq.s32.totalorder %s24, 1
      %p47 = por %p45, %p46
      %p49 = scmp.ne.s32.totalorder %s32, %s48
      %p50 = scmp.eq.s32.totalorder %s24, 0
      %p51 = por %p49, %p50
      %s53 = sadd.s32 %s52, 1
      %p56 = scmp.eq.s32.totalorder %s18, 1
      %p57 = scmp.ne.s32.totalorder %s52, %s54
      %p58 = scmp.eq.s32.totalorder %s18, 0
      %p59 = por %p57, %p58
      %p60 = scmp.ne.s32.totalorder %s52, %s54
      %p61 = scmp.eq.s32.totalorder %s23, 1
      %p62 = por %p60, %p61
      %p63 = scmp.ne.s32.totalorder %s54, %s55
      %p64 = scmp.eq.s32.totalorder %s23, 0
      %p65 = por %p63, %p64
      %p66 = scmp.ne.s32.totalorder %s54, %s55
      %p67 = scmp.eq.s32.totalorder %s24, 1
      %p68 = por %p66, %p67
      %p70 = scmp.ne.s32.totalorder %s55, %s69
      %p71 = scmp.eq.s32.totalorder %s24, 0
      %p72 = por %p70, %p71
      %s74 = sadd.s32 %s73, 1
      %p77 = scmp.eq.s32.totalorder %s18, 1
      %p78 = scmp.ne.s32.totalorder %s73, %s75
      %p79 = scmp.eq.s32.totalorder %s18, 0
      %p80 = por %p78, %p79
      %p81 = scmp.ne.s32.totalorder %s73, %s75
      %p82 = scmp.eq.s32.totalorder %s23, 1
      %p83 = por %p81, %p82
      %p84 = scmp.ne.s32.totalorder %s75, %s76
      %p85 = scmp.eq.s32.totalorder %s23, 0
      %p86 = por %p84, %p85
      %p87 = scmp.ne.s32.totalorder %s75, %s76
      %p88 = scmp.eq.s32.totalorder %s24, 1
      %p89 = por %p87, %p88
      %p91 = scmp.ne.s32.totalorder %s76, %s90
      %p92 = scmp.eq.s32.totalorder %s24, 0
      %p93 = por %p91, %p92
      %s95 = sadd.s32 %s94, 1
      %p98 = scmp.eq.s32.totalorder %s18, 1
      %p99 = scmp.ne.s32.totalorder %s94, %s96
      %p100 = scmp.eq.s32.totalorder %s18, 0
      %p101 = por %p99, %p100
      %p102 = scmp.ne.s32.totalorder %s94, %s96
      %p103 = scmp.eq.s32.totalorder %s23, 1
      %p104 = por %p102, %p103
      %p105 = scmp.ne.s32.totalorder %s96, %s97
      %p106 = scmp.eq.s32.totalorder %s23, 0
      %p107 = por %p105, %p106
      %p108 = scmp.ne.s32.totalorder %s96, %s97
      %p109 = scmp.eq.s32.totalorder %s24, 1
      %p110 = por %p108, %p109
      %p112 = scmp.ne.s32.totalorder %s97, %s111
      %p113 = scmp.eq.s32.totalorder %s24, 0
      %p114 = por %p112, %p113
      %s116 = sadd.s32 %s115, 1
      %p119 = scmp.eq.s32.totalorder %s18, 1
      %p120 = scmp.ne.s32.totalorder %s115, %s117
      %p121 = scmp.eq.s32.totalorder %s18, 0
      %p122 = por %p120, %p121
      %p123 = scmp.ne.s32.totalorder %s115, %s117
      %p124 = scmp.eq.s32.totalorder %s23, 1
      %p125 = por %p123, %p124
      %p126 = scmp.ne.s32.totalorder %s117, %s118
      %p127 = scmp.eq.s32.totalorder %s23, 0
      %p128 = por %p126, %p127
      %p129 = scmp.ne.s32.totalorder %s117, %s118
      %p130 = scmp.eq.s32.totalorder %s24, 1
      %p131 = por %p129, %p130
      %p133 = scmp.ne.s32.totalorder %s118, %s132
      %p134 = scmp.eq.s32.totalorder %s24, 0
      %p135 = por %p133, %p134
      %s136 = ssub.s32 %s18, %s25
      %p137 = scmp.eq.s32.totalorder %s136, 0
      %s139 = sadd.s32 %s138, 1
      %s140 = scalar_select %p137, %s138, %s139
      %p143 = pneg %p137
      %p144 = scmp.eq.s32.totalorder %s18, 1
      %p145 = por %p143, %p144
      %p146 = scmp.ne.s32.totalorder %s138, %s141
      %p147 = scmp.eq.s32.totalorder %s18, 0
      %p148 = por %p146, %p147
      %p149 = scmp.ne.s32.totalorder %s138, %s141
      %p150 = scmp.eq.s32.totalorder %s23, 1
      %p151 = por %p149, %p150
      %p152 = scmp.ne.s32.totalorder %s141, %s142
      %p153 = scmp.eq.s32.totalorder %s23, 0
      %p154 = por %p152, %p153
      %p155 = scmp.ne.s32.totalorder %s141, %s142
      %p156 = scmp.eq.s32.totalorder %s24, 1
      %p157 = por %p155, %p156
      %p159 = scmp.ne.s32.totalorder %s142, %s158
      %p160 = scmp.eq.s32.totalorder %s24, 0
      %p161 = por %p159, %p160
      %p162 = scmp.le.s32.totalorder 1, %s18
      %p163 = scmp.lt.s32.totalorder %s18, 3
      %p164 = pnand %p162, %p163
      %p165 = pneg %p164
      // Predicated region
      $region9: #{tpu_custom_call.1} parent=5 // pred_check
        _
      $region10: #{tpu_custom_call.1} parent=5 // pred_check_branch
        %167 = sbr.rel (%p164) target = $region12
      $region11: #{tpu_custom_call.1} parent=5 // pred_region
        %s168 = ssub.s32 %s18, 1
        // Predicated region
        $region13: #{tpu_custom_call.1} parent=11 // pred_check
          %p169 = pneg %p65
        $region14: #{tpu_custom_call.1} parent=11 // pred_check_branch
          %171 = sbr.rel (%p169) target = $region16
        $region15: #{tpu_custom_call.1} parent=11 // pred_region
          _
        $region16: #{tpu_custom_call.1} parent=11 // pred_fallthru
          _
        // Predicated region
        $region17: #{tpu_custom_call.1} parent=11 // pred_check
          %p172 = pneg %p86
        $region18: #{tpu_custom_call.1} parent=11 // pred_check_branch
          %174 = sbr.rel (%p172) target = $region20
        $region19: #{tpu_custom_call.1} parent=11 // pred_region
          %176 = vsyncadd [#allocation6], 0
          %s177 = sshll.u32 %s2, 4
          %s178 = int_to_ptr.hbm [resolvable:$true] %s177
          %s179 = sshll.u32 [#allocation5], 4
          %s180 = int_to_ptr.vmem [resolvable:$true] %s179
          %185 = dma.hbm_to_vmem [thread:$0]  %s178, 512, %s180, [#allocation6], 128, 128, 8
        $region20: #{tpu_custom_call.1} parent=11 // pred_fallthru
          _
        // Predicated region
        $region21: #{tpu_custom_call.1} parent=11 // pred_check
          %p186 = pneg %p107
        $region22: #{tpu_custom_call.1} parent=11 // pred_check_branch
          %188 = sbr.rel (%p186) target = $region24
        $region23: #{tpu_custom_call.1} parent=11 // pred_region
          _
        $region24: #{tpu_custom_call.1} parent=11 // pred_fallthru
          _
        // Predicated region
        $region25: #{tpu_custom_call.1} parent=11 // pred_check
          %p189 = pneg %p128
        $region26: #{tpu_custom_call.1} parent=11 // pred_check_branch
          %191 = sbr.rel (%p189) target = $region28
        $region27: #{tpu_custom_call.1} parent=11 // pred_region
          _
        $region28: #{tpu_custom_call.1} parent=11 // pred_fallthru
          _
      $region12: #{tpu_custom_call.1} parent=5 // pred_fallthru
        _
      %p192 = scmp.lt.s32.totalorder %s18, 2
      // Predicated region
      $region29: #{tpu_custom_call.1} parent=5 // pred_check
        %p193 = pneg %p192
      $region30: #{tpu_custom_call.1} parent=5 // pred_check_branch
        %195 = sbr.rel (%p193) target = $region32
      $region31: #{tpu_custom_call.1} parent=5 // pred_region
        // Predicated region
        $region33: #{tpu_custom_call.1} parent=31 // pred_check
          %p196 = pneg %p38
        $region34: #{tpu_custom_call.1} parent=31 // pred_check_branch
          %198 = sbr.rel (%p196) target = $region36
        $region35: #{tpu_custom_call.1} parent=31 // pred_region
          %s199 = sand.u32 %s28, 1
          %s200 = scalar_lea.sflag [#allocation3], %s199
          %s201 = sand.u32 %s28, 1
          %s202 = smul.addr %s201, 64
          %s203 = scalar_lea.vmem [#allocation2], %s202
          %s204 = smul.u32 2, %s18
          %206 = vsyncadd %s200, 0
          %s207 = smul.addr %s204, 8
          %s208 = scalar_lea.hbm %s0, %s207
          %s209 = sshll.u32 %s208, 4
          %s210 = int_to_ptr.hbm [resolvable:$true] %s209
          %s211 = sshll.u32 %s203, 4
          %s212 = int_to_ptr.vmem [resolvable:$true] %s211
          %217 = dma.hbm_to_vmem [thread:$0]  %s210, 1024, %s212, %s200, 512, 256, 16
        $region36: #{tpu_custom_call.1} parent=31 // pred_fallthru
          _
      $region32: #{tpu_custom_call.1} parent=5 // pred_fallthru
        _
      %p218 = scmp.le.s32.totalorder 1, %s18
      %p219 = scmp.lt.s32.totalorder %s18, 3
      %p220 = pnand %p218, %p219
      %p221 = pneg %p220
      // Predicated region
      $region37: #{tpu_custom_call.1} parent=5 // pred_check
        _
      $region38: #{tpu_custom_call.1} parent=5 // pred_check_branch
        %223 = sbr.rel (%p220) target = $region40
      $region39: #{tpu_custom_call.1} parent=5 // pred_region
        %s224 = ssub.s32 %s18, 1
        %s225 = sand.u32 %s31, 1
        %s226 = scalar_lea.sflag [#allocation3], %s225
        %s227 = sand.u32 %s31, 1
        %s228 = smul.addr %s227, 64
        %s229 = scalar_lea.vmem [#allocation2], %s228
        // Predicated region
        $region41: #{tpu_custom_call.1} parent=39 // pred_check
          %p230 = pneg %p44
        $region42: #{tpu_custom_call.1} parent=39 // pred_check_branch
          %232 = sbr.rel (%p230) target = $region44
        $region43: #{tpu_custom_call.1} parent=39 // pred_region
          %234 = dma.done %s226, 1024
        $region44: #{tpu_custom_call.1} parent=39 // pred_fallthru
          _
        // Predicated region
        $region45: #{tpu_custom_call.1} parent=39 // pred_check
          %p235 = pneg %p86
        $region46: #{tpu_custom_call.1} parent=39 // pred_check_branch
          %237 = sbr.rel (%p235) target = $region48
        $region47: #{tpu_custom_call.1} parent=39 // pred_region
          %239 = dma.done [#allocation6], 512
        $region48: #{tpu_custom_call.1} parent=39 // pred_fallthru
          _
        %s240 = sand.u32 %s31, 1
        %s241 = scalar_lea.sflag [#allocation3], %s240
        %s242 = sand.u32 %s31, 1
        %s243 = smul.addr %s242, 64
        %s244 = scalar_lea.vmem [#allocation2], %s243
        %p245 = pneg %p44
        %p246 = pneg %p41
        %p247 = pneg %p65
        %p248 = pneg %p62
        %p249 = pneg %p86
        %p250 = pneg %p83
        %p251 = pneg %p107
        %p252 = pneg %p104
        %p253 = pneg %p128
        %p254 = pneg %p125
        %p255 = pneg %p154
        %p256 = pneg %p151
        %s257 = sand.u32 %s141, 1
        %s258 = scalar_lea.sflag [#allocation4], %s257
        %s259 = sand.u32 %s141, 1
        %s260 = smul.addr %s259, 64
        %s261 = scalar_lea.vmem [#allocation7], %s260
        %s262 = smul.u32 2, %s23
        %s263 = smul.u32 2, %s23
        %v264 = vld [vmem:[%s229] sm:$0xff]
        %v265 = vld [vmem:[%s229 + $0x8] sm:$0xff]
        %v266 = vld [vmem:[%s229 + $0x10] sm:$0xff]
        %v267 = vld [vmem:[%s229 + $0x18] sm:$0xff]
        %v268 = vld [vmem:[%s229 + $0x20] sm:$0xff]
        %v269 = vld [vmem:[%s229 + $0x28] sm:$0xff]
        %v270 = vld [vmem:[%s229 + $0x30] sm:$0xff]
        %v271 = vld [vmem:[%s229 + $0x38] sm:$0xff]
        %v272 = vld [vmem:[%s1] sm:$0xff]
        %v273 = vld [vmem:[%s1 + $0x8] sm:$0xff]
        %v274 = vld [vmem:[%s1 + $0x10] sm:$0xff]
        %v275 = vld [vmem:[%s1 + $0x18] sm:$0xff]
        %v276 = vld [vmem:[%s1 + $0x20] sm:$0xff]
        %v277 = vld [vmem:[%s1 + $0x28] sm:$0xff]
        %v278 = vld [vmem:[%s1 + $0x30] sm:$0xff]
        %v279 = vld [vmem:[%s1 + $0x38] sm:$0xff]
        %v280 = vld [vmem:[%s1 + $0x40] sm:$0xff]
        %v281 = vld [vmem:[%s1 + $0x48] sm:$0xff]
        %v282 = vld [vmem:[%s1 + $0x50] sm:$0xff]
        %v283 = vld [vmem:[%s1 + $0x58] sm:$0xff]
        %v284 = vld [vmem:[%s1 + $0x60] sm:$0xff]
        %v285 = vld [vmem:[%s1 + $0x68] sm:$0xff]
        %v286 = vld [vmem:[%s1 + $0x70] sm:$0xff]
        %v287 = vld [vmem:[%s1 + $0x78] sm:$0xff]
        %v288 = vld [vmem:[%s1 + $0x80] sm:$0xff]
        %v289 = vld [vmem:[%s1 + $0x88] sm:$0xff]
        %v290 = vld [vmem:[%s1 + $0x90] sm:$0xff]
        %v291 = vld [vmem:[%s1 + $0x98] sm:$0xff]
        %v292 = vld [vmem:[%s1 + $0xa0] sm:$0xff]
        %v293 = vld [vmem:[%s1 + $0xa8] sm:$0xff]
        %v294 = vld [vmem:[%s1 + $0xb0] sm:$0xff]
        %v295 = vld [vmem:[%s1 + $0xb8] sm:$0xff]
        %v296 = vld [vmem:[%s1 + $0xc0] sm:$0xff]
        %v297 = vld [vmem:[%s1 + $0xc8] sm:$0xff]
        %v298 = vld [vmem:[%s1 + $0xd0] sm:$0xff]
        %v299 = vld [vmem:[%s1 + $0xd8] sm:$0xff]
        %v300 = vld [vmem:[%s1 + $0xe0] sm:$0xff]
        %v301 = vld [vmem:[%s1 + $0xe8] sm:$0xff]
        %v302 = vld [vmem:[%s1 + $0xf0] sm:$0xff]
        %v303 = vld [vmem:[%s1 + $0xf8] sm:$0xff]
        %v304 = vld [vmem:[%s1 + $0x100] sm:$0xff]
        %v305 = vld [vmem:[%s1 + $0x108] sm:$0xff]
        %v306 = vld [vmem:[%s1 + $0x110] sm:$0xff]
        %v307 = vld [vmem:[%s1 + $0x118] sm:$0xff]
        %v308 = vld [vmem:[%s1 + $0x120] sm:$0xff]
        %v309 = vld [vmem:[%s1 + $0x128] sm:$0xff]
        %v310 = vld [vmem:[%s1 + $0x130] sm:$0xff]
        %v311 = vld [vmem:[%s1 + $0x138] sm:$0xff]
        %v312 = vld [vmem:[%s1 + $0x140] sm:$0xff]
        %v313 = vld [vmem:[%s1 + $0x148] sm:$0xff]
        %v314 = vld [vmem:[%s1 + $0x150] sm:$0xff]
        %v315 = vld [vmem:[%s1 + $0x158] sm:$0xff]
        %v316 = vld [vmem:[%s1 + $0x160] sm:$0xff]
        %v317 = vld [vmem:[%s1 + $0x168] sm:$0xff]
        %v318 = vld [vmem:[%s1 + $0x170] sm:$0xff]
        %v319 = vld [vmem:[%s1 + $0x178] sm:$0xff]
        %vm320 = vcmask 261120
        %v322 = vsel %vm320, %v272, 0
        %v325 = vsel %vm320, %v273, 0
        %v328 = vsel %vm320, %v274, 0
        %v331 = vsel %vm320, %v275, 0
        %v334 = vsel %vm320, %v276, 0
        %v337 = vsel %vm320, %v277, 0
        %v340 = vsel %vm320, %v278, 0
        %v343 = vsel %vm320, %v279, 0
        %v346 = vsel %vm320, %v280, 0
        %v349 = vsel %vm320, %v281, 0
        %v352 = vsel %vm320, %v282, 0
        %v355 = vsel %vm320, %v283, 0
        %v358 = vsel %vm320, %v284, 0
        %v361 = vsel %vm320, %v285, 0
        %v364 = vsel %vm320, %v286, 0
        %v367 = vsel %vm320, %v287, 0
        %v370 = vsel %vm320, %v288, 0
        %v373 = vsel %vm320, %v289, 0
        %v376 = vsel %vm320, %v290, 0
        %v379 = vsel %vm320, %v291, 0
        %v382 = vsel %vm320, %v292, 0
        %v385 = vsel %vm320, %v293, 0
        %v388 = vsel %vm320, %v294, 0
        %v391 = vsel %vm320, %v295, 0
        %v394 = vsel %vm320, %v296, 0
        %v397 = vsel %vm320, %v297, 0
        %v400 = vsel %vm320, %v298, 0
        %v403 = vsel %vm320, %v299, 0
        %v406 = vsel %vm320, %v300, 0
        %v409 = vsel %vm320, %v301, 0
        %v412 = vsel %vm320, %v302, 0
        %v415 = vsel %vm320, %v303, 0
        %v418 = vsel %vm320, %v304, 0
        %v421 = vsel %vm320, %v305, 0
        %v424 = vsel %vm320, %v306, 0
        %v427 = vsel %vm320, %v307, 0
        %v430 = vsel %vm320, %v308, 0
        %v433 = vsel %vm320, %v309, 0
        %v436 = vsel %vm320, %v310, 0
        %v439 = vsel %vm320, %v311, 0
        %v442 = vsel %vm320, %v312, 0
        %v445 = vsel %vm320, %v313, 0
        %v448 = vsel %vm320, %v314, 0
        %v451 = vsel %vm320, %v315, 0
        %v454 = vsel %vm320, %v316, 0
        %v457 = vsel %vm320, %v317, 0
        %v460 = vsel %vm320, %v318, 0
        %v463 = vsel %vm320, %v319, 0
        %465 = vmatpush.msra.mxu0 0.0
        %466 = vmatpush.msra.mxu0 0.0
        %467 = vmatpush.msra.mxu0 0.0
        %468 = vmatpush.msra.mxu0 0.0
        %469 = vmatpush.msra.mxu0 0.0
        %470 = vmatpush.msra.mxu0 0.0
        %471 = vmatpush.msra.mxu0 0.0
        %472 = vmatpush.msra.mxu0 0.0
        %473 = vmatpush.msra.mxu0 0.0
        %474 = vmatpush.msra.mxu0 0.0
        %475 = vmatpush.msra.mxu0 0.0
        %476 = vmatpush.msra.mxu0 0.0
        %477 = vmatpush.msra.mxu0 %v270
        %478 = vmatpush.msra.mxu0 %v268
        %479 = vmatpush.msra.mxu0 %v266
        %480 = vmatpush.msra.mxu0 %v264
        %481 = vmatmul.f32.gmra.mxu0 %v322
        %v482 = vpop.f32.mrf.mxu0
        %v483 = vadd.f32 0.0, %v482
        %484 = vmatmul.f32.gmra.mxu0 %v325
        %v485 = vpop.f32.mrf.mxu0
        %v486 = vadd.f32 0.0, %v485
        %487 = vmatmul.f32.gmra.mxu0 %v328
        %v488 = vpop.f32.mrf.mxu0
        %v489 = vadd.f32 0.0, %v488
        %490 = vmatmul.f32.gmra.mxu0 %v331
        %v491 = vpop.f32.mrf.mxu0
        %v492 = vadd.f32 0.0, %v491
        %493 = vmatmul.f32.gmra.mxu0 %v334
        %v494 = vpop.f32.mrf.mxu0
        %v495 = vadd.f32 0.0, %v494
        %496 = vmatmul.f32.gmra.mxu0 %v337
        %v497 = vpop.f32.mrf.mxu0
        %v498 = vadd.f32 0.0, %v497
        %499 = vmatmul.f32.gmra.mxu0 %v340
        %v500 = vpop.f32.mrf.mxu0
        %v501 = vadd.f32 0.0, %v500
        %502 = vmatmul.f32.gmra.mxu0 %v343
        %v503 = vpop.f32.mrf.mxu0
        %v504 = vadd.f32 0.0, %v503
        %505 = vmatmul.f32.gmra.mxu0 %v346
        %v506 = vpop.f32.mrf.mxu0
        %v507 = vadd.f32 0.0, %v506
        %508 = vmatmul.f32.gmra.mxu0 %v349
        %v509 = vpop.f32.mrf.mxu0
        %v510 = vadd.f32 0.0, %v509
        %511 = vmatmul.f32.gmra.mxu0 %v352
        %v512 = vpop.f32.mrf.mxu0
        %v513 = vadd.f32 0.0, %v512
        %514 = vmatmul.f32.gmra.mxu0 %v355
        %v515 = vpop.f32.mrf.mxu0
        %v516 = vadd.f32 0.0, %v515
        %517 = vmatmul.f32.gmra.mxu0 %v358
        %v518 = vpop.f32.mrf.mxu0
        %v519 = vadd.f32 0.0, %v518
        %520 = vmatmul.f32.gmra.mxu0 %v361
        %v521 = vpop.f32.mrf.mxu0
        %v522 = vadd.f32 0.0, %v521
        %523 = vmatmul.f32.gmra.mxu0 %v364
        %v524 = vpop.f32.mrf.mxu0
        %v525 = vadd.f32 0.0, %v524
        %526 = vmatmul.f32.gmra.mxu0 %v367
        %v527 = vpop.f32.mrf.mxu0
        %v528 = vadd.f32 0.0, %v527
        %529 = vmatmul.f32.gmra.mxu0 %v370
        %v530 = vpop.f32.mrf.mxu0
        %v531 = vadd.f32 0.0, %v530
        %532 = vmatmul.f32.gmra.mxu0 %v373
        %v533 = vpop.f32.mrf.mxu0
        %v534 = vadd.f32 0.0, %v533
        %535 = vmatmul.f32.gmra.mxu0 %v376
        %v536 = vpop.f32.mrf.mxu0
        %v537 = vadd.f32 0.0, %v536
        %538 = vmatmul.f32.gmra.mxu0 %v379
        %v539 = vpop.f32.mrf.mxu0
        %v540 = vadd.f32 0.0, %v539
        %541 = vmatmul.f32.gmra.mxu0 %v382
        %v542 = vpop.f32.mrf.mxu0
        %v543 = vadd.f32 0.0, %v542
        %544 = vmatmul.f32.gmra.mxu0 %v385
        %v545 = vpop.f32.mrf.mxu0
        %v546 = vadd.f32 0.0, %v545
        %547 = vmatmul.f32.gmra.mxu0 %v388
        %v548 = vpop.f32.mrf.mxu0
        %v549 = vadd.f32 0.0, %v548
        %550 = vmatmul.f32.gmra.mxu0 %v391
        %v551 = vpop.f32.mrf.mxu0
        %v552 = vadd.f32 0.0, %v551
        %553 = vmatmul.f32.gmra.mxu0 %v394
        %v554 = vpop.f32.mrf.mxu0
        %v555 = vadd.f32 0.0, %v554
        %556 = vmatmul.f32.gmra.mxu0 %v397
        %v557 = vpop.f32.mrf.mxu0
        %v558 = vadd.f32 0.0, %v557
        %559 = vmatmul.f32.gmra.mxu0 %v400
        %v560 = vpop.f32.mrf.mxu0
        %v561 = vadd.f32 0.0, %v560
        %562 = vmatmul.f32.gmra.mxu0 %v403
        %v563 = vpop.f32.mrf.mxu0
        %v564 = vadd.f32 0.0, %v563
        %565 = vmatmul.f32.gmra.mxu0 %v406
        %v566 = vpop.f32.mrf.mxu0
        %v567 = vadd.f32 0.0, %v566
        %568 = vmatmul.f32.gmra.mxu0 %v409
        %v569 = vpop.f32.mrf.mxu0
        %v570 = vadd.f32 0.0, %v569
        %571 = vmatmul.f32.gmra.mxu0 %v412
        %v572 = vpop.f32.mrf.mxu0
        %v573 = vadd.f32 0.0, %v572
        %574 = vmatmul.f32.gmra.mxu0 %v415
        %v575 = vpop.f32.mrf.mxu0
        %v576 = vadd.f32 0.0, %v575
        %577 = vmatmul.f32.gmra.mxu0 %v418
        %v578 = vpop.f32.mrf.mxu0
        %v579 = vadd.f32 0.0, %v578
        %580 = vmatmul.f32.gmra.mxu0 %v421
        %v581 = vpop.f32.mrf.mxu0
        %v582 = vadd.f32 0.0, %v581
        %583 = vmatmul.f32.gmra.mxu0 %v424
        %v584 = vpop.f32.mrf.mxu0
        %v585 = vadd.f32 0.0, %v584
        %586 = vmatmul.f32.gmra.mxu0 %v427
        %v587 = vpop.f32.mrf.mxu0
        %v588 = vadd.f32 0.0, %v587
        %589 = vmatmul.f32.gmra.mxu0 %v430
        %v590 = vpop.f32.mrf.mxu0
        %v591 = vadd.f32 0.0, %v590
        %592 = vmatmul.f32.gmra.mxu0 %v433
        %v593 = vpop.f32.mrf.mxu0
        %v594 = vadd.f32 0.0, %v593
        %595 = vmatmul.f32.gmra.mxu0 %v436
        %v596 = vpop.f32.mrf.mxu0
        %v597 = vadd.f32 0.0, %v596
        %598 = vmatmul.f32.gmra.mxu0 %v439
        %v599 = vpop.f32.mrf.mxu0
        %v600 = vadd.f32 0.0, %v599
        %601 = vmatmul.f32.gmra.mxu0 %v442
        %v602 = vpop.f32.mrf.mxu0
        %v603 = vadd.f32 0.0, %v602
        %604 = vmatmul.f32.gmra.mxu0 %v445
        %v605 = vpop.f32.mrf.mxu0
        %v606 = vadd.f32 0.0, %v605
        %607 = vmatmul.f32.gmra.mxu0 %v448
        %v608 = vpop.f32.mrf.mxu0
        %v609 = vadd.f32 0.0, %v608
        %610 = vmatmul.f32.gmra.mxu0 %v451
        %v611 = vpop.f32.mrf.mxu0
        %v612 = vadd.f32 0.0, %v611
        %613 = vmatmul.f32.gmra.mxu0 %v454
        %v614 = vpop.f32.mrf.mxu0
        %v615 = vadd.f32 0.0, %v614
        %616 = vmatmul.f32.gmra.mxu0 %v457
        %v617 = vpop.f32.mrf.mxu0
        %v618 = vadd.f32 0.0, %v617
        %619 = vmatmul.f32.gmra.mxu0 %v460
        %v620 = vpop.f32.mrf.mxu0
        %v621 = vadd.f32 0.0, %v620
        %622 = vmatmul.f32.gmra.mxu0 %v463
        %v623 = vpop.f32.mrf.mxu0
        %v624 = vadd.f32 0.0, %v623
        %625 = vdwg.mxu0
        %626 = vmatpush.msra.mxu0 0.0
        %627 = vmatpush.msra.mxu0 0.0
        %628 = vmatpush.msra.mxu0 0.0
        %629 = vmatpush.msra.mxu0 0.0
        %630 = vmatpush.msra.mxu0 0.0
        %631 = vmatpush.msra.mxu0 0.0
        %632 = vmatpush.msra.mxu0 0.0
        %633 = vmatpush.msra.mxu0 0.0
        %634 = vmatpush.msra.mxu0 0.0
        %635 = vmatpush.msra.mxu0 0.0
        %636 = vmatpush.msra.mxu0 0.0
        %637 = vmatpush.msra.mxu0 0.0
        %638 = vmatpush.msra.mxu0 %v271
        %639 = vmatpush.msra.mxu0 %v269
        %640 = vmatpush.msra.mxu0 %v267
        %641 = vmatpush.msra.mxu0 %v265
        %642 = vmatmul.f32.gmra.mxu0 %v322
        %v643 = vpop.f32.mrf.mxu0
        %v644 = vadd.f32 0.0, %v643
        %645 = vmatmul.f32.gmra.mxu0 %v325
        %v646 = vpop.f32.mrf.mxu0
        %v647 = vadd.f32 0.0, %v646
        %648 = vmatmul.f32.gmra.mxu0 %v328
        %v649 = vpop.f32.mrf.mxu0
        %v650 = vadd.f32 0.0, %v649
        %651 = vmatmul.f32.gmra.mxu0 %v331
        %v652 = vpop.f32.mrf.mxu0
        %v653 = vadd.f32 0.0, %v652
        %654 = vmatmul.f32.gmra.mxu0 %v334
        %v655 = vpop.f32.mrf.mxu0
        %v656 = vadd.f32 0.0, %v655
        %657 = vmatmul.f32.gmra.mxu0 %v337
        %v658 = vpop.f32.mrf.mxu0
        %v659 = vadd.f32 0.0, %v658
        %660 = vmatmul.f32.gmra.mxu0 %v340
        %v661 = vpop.f32.mrf.mxu0
        %v662 = vadd.f32 0.0, %v661
        %663 = vmatmul.f32.gmra.mxu0 %v343
        %v664 = vpop.f32.mrf.mxu0
        %v665 = vadd.f32 0.0, %v664
        %666 = vmatmul.f32.gmra.mxu0 %v346
        %v667 = vpop.f32.mrf.mxu0
        %v668 = vadd.f32 0.0, %v667
        %669 = vmatmul.f32.gmra.mxu0 %v349
        %v670 = vpop.f32.mrf.mxu0
        %v671 = vadd.f32 0.0, %v670
        %672 = vmatmul.f32.gmra.mxu0 %v352
        %v673 = vpop.f32.mrf.mxu0
        %v674 = vadd.f32 0.0, %v673
        %675 = vmatmul.f32.gmra.mxu0 %v355
        %v676 = vpop.f32.mrf.mxu0
        %v677 = vadd.f32 0.0, %v676
        %678 = vmatmul.f32.gmra.mxu0 %v358
        %v679 = vpop.f32.mrf.mxu0
        %v680 = vadd.f32 0.0, %v679
        %681 = vmatmul.f32.gmra.mxu0 %v361
        %v682 = vpop.f32.mrf.mxu0
        %v683 = vadd.f32 0.0, %v682
        %684 = vmatmul.f32.gmra.mxu0 %v364
        %v685 = vpop.f32.mrf.mxu0
        %v686 = vadd.f32 0.0, %v685
        %687 = vmatmul.f32.gmra.mxu0 %v367
        %v688 = vpop.f32.mrf.mxu0
        %v689 = vadd.f32 0.0, %v688
        %690 = vmatmul.f32.gmra.mxu0 %v370
        %v691 = vpop.f32.mrf.mxu0
        %v692 = vadd.f32 0.0, %v691
        %693 = vmatmul.f32.gmra.mxu0 %v373
        %v694 = vpop.f32.mrf.mxu0
        %v695 = vadd.f32 0.0, %v694
        %696 = vmatmul.f32.gmra.mxu0 %v376
        %v697 = vpop.f32.mrf.mxu0
        %v698 = vadd.f32 0.0, %v697
        %699 = vmatmul.f32.gmra.mxu0 %v379
        %v700 = vpop.f32.mrf.mxu0
        %v701 = vadd.f32 0.0, %v700
        %702 = vmatmul.f32.gmra.mxu0 %v382
        %v703 = vpop.f32.mrf.mxu0
        %v704 = vadd.f32 0.0, %v703
        %705 = vmatmul.f32.gmra.mxu0 %v385
        %v706 = vpop.f32.mrf.mxu0
        %v707 = vadd.f32 0.0, %v706
        %708 = vmatmul.f32.gmra.mxu0 %v388
        %v709 = vpop.f32.mrf.mxu0
        %v710 = vadd.f32 0.0, %v709
        %711 = vmatmul.f32.gmra.mxu0 %v391
        %v712 = vpop.f32.mrf.mxu0
        %v713 = vadd.f32 0.0, %v712
        %714 = vmatmul.f32.gmra.mxu0 %v394
        %v715 = vpop.f32.mrf.mxu0
        %v716 = vadd.f32 0.0, %v715
        %717 = vmatmul.f32.gmra.mxu0 %v397
        %v718 = vpop.f32.mrf.mxu0
        %v719 = vadd.f32 0.0, %v718
        %720 = vmatmul.f32.gmra.mxu0 %v400
        %v721 = vpop.f32.mrf.mxu0
        %v722 = vadd.f32 0.0, %v721
        %723 = vmatmul.f32.gmra.mxu0 %v403
        %v724 = vpop.f32.mrf.mxu0
        %v725 = vadd.f32 0.0, %v724
        %726 = vmatmul.f32.gmra.mxu0 %v406
        %v727 = vpop.f32.mrf.mxu0
        %v728 = vadd.f32 0.0, %v727
        %729 = vmatmul.f32.gmra.mxu0 %v409
        %v730 = vpop.f32.mrf.mxu0
        %v731 = vadd.f32 0.0, %v730
        %732 = vmatmul.f32.gmra.mxu0 %v412
        %v733 = vpop.f32.mrf.mxu0
        %v734 = vadd.f32 0.0, %v733
        %735 = vmatmul.f32.gmra.mxu0 %v415
        %v736 = vpop.f32.mrf.mxu0
        %v737 = vadd.f32 0.0, %v736
        %738 = vmatmul.f32.gmra.mxu0 %v418
        %v739 = vpop.f32.mrf.mxu0
        %v740 = vadd.f32 0.0, %v739
        %741 = vmatmul.f32.gmra.mxu0 %v421
        %v742 = vpop.f32.mrf.mxu0
        %v743 = vadd.f32 0.0, %v742
        %744 = vmatmul.f32.gmra.mxu0 %v424
        %v745 = vpop.f32.mrf.mxu0
        %v746 = vadd.f32 0.0, %v745
        %747 = vmatmul.f32.gmra.mxu0 %v427
        %v748 = vpop.f32.mrf.mxu0
        %v749 = vadd.f32 0.0, %v748
        %750 = vmatmul.f32.gmra.mxu0 %v430
        %v751 = vpop.f32.mrf.mxu0
        %v752 = vadd.f32 0.0, %v751
        %753 = vmatmul.f32.gmra.mxu0 %v433
        %v754 = vpop.f32.mrf.mxu0
        %v755 = vadd.f32 0.0, %v754
        %756 = vmatmul.f32.gmra.mxu0 %v436
        %v757 = vpop.f32.mrf.mxu0
        %v758 = vadd.f32 0.0, %v757
        %759 = vmatmul.f32.gmra.mxu0 %v439
        %v760 = vpop.f32.mrf.mxu0
        %v761 = vadd.f32 0.0, %v760
        %762 = vmatmul.f32.gmra.mxu0 %v442
        %v763 = vpop.f32.mrf.mxu0
        %v764 = vadd.f32 0.0, %v763
        %765 = vmatmul.f32.gmra.mxu0 %v445
        %v766 = vpop.f32.mrf.mxu0
        %v767 = vadd.f32 0.0, %v766
        %768 = vmatmul.f32.gmra.mxu0 %v448
        %v769 = vpop.f32.mrf.mxu0
        %v770 = vadd.f32 0.0, %v769
        %771 = vmatmul.f32.gmra.mxu0 %v451
        %v772 = vpop.f32.mrf.mxu0
        %v773 = vadd.f32 0.0, %v772
        %774 = vmatmul.f32.gmra.mxu0 %v454
        %v775 = vpop.f32.mrf.mxu0
        %v776 = vadd.f32 0.0, %v775
        %777 = vmatmul.f32.gmra.mxu0 %v457
        %v778 = vpop.f32.mrf.mxu0
        %v779 = vadd.f32 0.0, %v778
        %780 = vmatmul.f32.gmra.mxu0 %v460
        %v781 = vpop.f32.mrf.mxu0
        %v782 = vadd.f32 0.0, %v781
        %783 = vmatmul.f32.gmra.mxu0 %v463
        %v784 = vpop.f32.mrf.mxu0
        %v785 = vadd.f32 0.0, %v784
        %786 = vdwg.mxu0
        %v787 = vmax.f32 %v483, %v486
        %v788 = vmax.f32 %v787, %v489
        %v789 = vmax.f32 %v788, %v492
        %v790 = vrot.slane %v789, 4
        %v791 = vmax.f32 %v789, %v790
        %v792 = vrot.slane %v791, 2
        %v793 = vmax.f32 %v791, %v792
        %v794 = vrot.slane %v793, 1
        %v795 = vmax.f32 %v793, %v794
        %v796 = vmax.f32 %v644, %v647
        %v797 = vmax.f32 %v796, %v650
        %v798 = vmax.f32 %v797, %v653
        %v799 = vrot.slane %v798, 4
        %v800 = vmax.f32 %v798, %v799
        %v801 = vrot.slane %v800, 2
        %v802 = vmax.f32 %v800, %v801
        %v803 = vrot.slane %v802, 1
        %v804 = vmax.f32 %v802, %v803
        %v805 = vmax.f32 %v495, %v498
        %v806 = vmax.f32 %v805, %v501
        %v807 = vmax.f32 %v806, %v504
        %v808 = vrot.slane %v807, 4
        %v809 = vmax.f32 %v807, %v808
        %v810 = vrot.slane %v809, 2
        %v811 = vmax.f32 %v809, %v810
        %v812 = vrot.slane %v811, 1
        %v813 = vmax.f32 %v811, %v812
        %v814 = vmax.f32 %v656, %v659
        %v815 = vmax.f32 %v814, %v662
        %v816 = vmax.f32 %v815, %v665
        %v817 = vrot.slane %v816, 4
        %v818 = vmax.f32 %v816, %v817
        %v819 = vrot.slane %v818, 2
        %v820 = vmax.f32 %v818, %v819
        %v821 = vrot.slane %v820, 1
        %v822 = vmax.f32 %v820, %v821
        %v823 = vmax.f32 %v507, %v510
        %v824 = vmax.f32 %v823, %v513
        %v825 = vmax.f32 %v824, %v516
        %v826 = vrot.slane %v825, 4
        %v827 = vmax.f32 %v825, %v826
        %v828 = vrot.slane %v827, 2
        %v829 = vmax.f32 %v827, %v828
        %v830 = vrot.slane %v829, 1
        %v831 = vmax.f32 %v829, %v830
        %v832 = vmax.f32 %v668, %v671
        %v833 = vmax.f32 %v832, %v674
        %v834 = vmax.f32 %v833, %v677
        %v835 = vrot.slane %v834, 4
        %v836 = vmax.f32 %v834, %v835
        %v837 = vrot.slane %v836, 2
        %v838 = vmax.f32 %v836, %v837
        %v839 = vrot.slane %v838, 1
        %v840 = vmax.f32 %v838, %v839
        %v841 = vmax.f32 %v519, %v522
        %v842 = vmax.f32 %v841, %v525
        %v843 = vmax.f32 %v842, %v528
        %v844 = vrot.slane %v843, 4
        %v845 = vmax.f32 %v843, %v844
        %v846 = vrot.slane %v845, 2
        %v847 = vmax.f32 %v845, %v846
        %v848 = vrot.slane %v847, 1
        %v849 = vmax.f32 %v847, %v848
        %v850 = vmax.f32 %v680, %v683
        %v851 = vmax.f32 %v850, %v686
        %v852 = vmax.f32 %v851, %v689
        %v853 = vrot.slane %v852, 4
        %v854 = vmax.f32 %v852, %v853
        %v855 = vrot.slane %v854, 2
        %v856 = vmax.f32 %v854, %v855
        %v857 = vrot.slane %v856, 1
        %v858 = vmax.f32 %v856, %v857
        %v859 = vsub.f32 %v483, %v795
        %v860 = vsub.f32 %v644, %v804
        %v861 = vsub.f32 %v486, %v795
        %v862 = vsub.f32 %v647, %v804
        %v863 = vsub.f32 %v489, %v795
        %v864 = vsub.f32 %v650, %v804
        %v865 = vsub.f32 %v492, %v795
        %v866 = vsub.f32 %v653, %v804
        %v867 = vsub.f32 %v495, %v813
        %v868 = vsub.f32 %v656, %v822
        %v869 = vsub.f32 %v498, %v813
        %v870 = vsub.f32 %v659, %v822
        %v871 = vsub.f32 %v501, %v813
        %v872 = vsub.f32 %v662, %v822
        %v873 = vsub.f32 %v504, %v813
        %v874 = vsub.f32 %v665, %v822
        %v875 = vsub.f32 %v507, %v831
        %v876 = vsub.f32 %v668, %v840
        %v877 = vsub.f32 %v510, %v831
        %v878 = vsub.f32 %v671, %v840
        %v879 = vsub.f32 %v513, %v831
        %v880 = vsub.f32 %v674, %v840
        %v881 = vsub.f32 %v516, %v831
        %v882 = vsub.f32 %v677, %v840
        %v883 = vsub.f32 %v519, %v849
        %v884 = vsub.f32 %v680, %v858
        %v885 = vsub.f32 %v522, %v849
        %v886 = vsub.f32 %v683, %v858
        %v887 = vsub.f32 %v525, %v849
        %v888 = vsub.f32 %v686, %v858
        %v889 = vsub.f32 %v528, %v849
        %v890 = vsub.f32 %v689, %v858
        %v891 = vmul.f32 %v859, 1.442695
        %v892 = vpow.pop %v891
        %v893 = vmul.f32 %v860, 1.442695
        %v894 = vpow.pop %v893
        %v895 = vmul.f32 %v861, 1.442695
        %v896 = vpow.pop %v895
        %v897 = vmul.f32 %v862, 1.442695
        %v898 = vpow.pop %v897
        %v899 = vmul.f32 %v863, 1.442695
        %v900 = vpow.pop %v899
        %v901 = vmul.f32 %v864, 1.442695
        %v902 = vpow.pop %v901
        %v903 = vmul.f32 %v865, 1.442695
        %v904 = vpow.pop %v903
        %v905 = vmul.f32 %v866, 1.442695
        %v906 = vpow.pop %v905
        %v907 = vmul.f32 %v867, 1.442695
        %v908 = vpow.pop %v907
        %v909 = vmul.f32 %v868, 1.442695
        %v910 = vpow.pop %v909
        %v911 = vmul.f32 %v869, 1.442695
        %v912 = vpow.pop %v911
        %v913 = vmul.f32 %v870, 1.442695
        %v914 = vpow.pop %v913
        %v915 = vmul.f32 %v871, 1.442695
        %v916 = vpow.pop %v915
        %v917 = vmul.f32 %v872, 1.442695
        %v918 = vpow.pop %v917
        %v919 = vmul.f32 %v873, 1.442695
        %v920 = vpow.pop %v919
        %v921 = vmul.f32 %v874, 1.442695
        %v922 = vpow.pop %v921
        %v923 = vmul.f32 %v875, 1.442695
        %v924 = vpow.pop %v923
        %v925 = vmul.f32 %v876, 1.442695
        %v926 = vpow.pop %v925
        %v927 = vmul.f32 %v877, 1.442695
        %v928 = vpow.pop %v927
        %v929 = vmul.f32 %v878, 1.442695
        %v930 = vpow.pop %v929
        %v931 = vmul.f32 %v879, 1.442695
        %v932 = vpow.pop %v931
        %v933 = vmul.f32 %v880, 1.442695
        %v934 = vpow.pop %v933
        %v935 = vmul.f32 %v881, 1.442695
        %v936 = vpow.pop %v935
        %v937 = vmul.f32 %v882, 1.442695
        %v938 = vpow.pop %v937
        %v939 = vmul.f32 %v883, 1.442695
        %v940 = vpow.pop %v939
        %v941 = vmul.f32 %v884, 1.442695
        %v942 = vpow.pop %v941
        %v943 = vmul.f32 %v885, 1.442695
        %v944 = vpow.pop %v943
        %v945 = vmul.f32 %v886, 1.442695
        %v946 = vpow.pop %v945
        %v947 = vmul.f32 %v887, 1.442695
        %v948 = vpow.pop %v947
        %v949 = vmul.f32 %v888, 1.442695
        %v950 = vpow.pop %v949
        %v951 = vmul.f32 %v889, 1.442695
        %v952 = vpow.pop %v951
        %v953 = vmul.f32 %v890, 1.442695
        %v954 = vpow.pop %v953
        %v955 = vadd.f32 %v892, %v896
        %v956 = vadd.f32 %v955, %v900
        %v957 = vadd.f32 %v956, %v904
        %v958 = vrot.slane %v957, 4
        %v959 = vadd.f32 %v957, %v958
        %v960 = vrot.slane %v959, 2
        %v961 = vadd.f32 %v959, %v960
        %v962 = vrot.slane %v961, 1
        %v963 = vadd.f32 %v961, %v962
        %v964 = vadd.f32 %v894, %v898
        %v965 = vadd.f32 %v964, %v902
        %v966 = vadd.f32 %v965, %v906
        %v967 = vrot.slane %v966, 4
        %v968 = vadd.f32 %v966, %v967
        %v969 = vrot.slane %v968, 2
        %v970 = vadd.f32 %v968, %v969
        %v971 = vrot.slane %v970, 1
        %v972 = vadd.f32 %v970, %v971
        %v973 = vadd.f32 %v908, %v912
        %v974 = vadd.f32 %v973, %v916
        %v975 = vadd.f32 %v974, %v920
        %v976 = vrot.slane %v975, 4
        %v977 = vadd.f32 %v975, %v976
        %v978 = vrot.slane %v977, 2
        %v979 = vadd.f32 %v977, %v978
        %v980 = vrot.slane %v979, 1
        %v981 = vadd.f32 %v979, %v980
        %v982 = vadd.f32 %v910, %v914
        %v983 = vadd.f32 %v982, %v918
        %v984 = vadd.f32 %v983, %v922
        %v985 = vrot.slane %v984, 4
        %v986 = vadd.f32 %v984, %v985
        %v987 = vrot.slane %v986, 2
        %v988 = vadd.f32 %v986, %v987
        %v989 = vrot.slane %v988, 1
        %v990 = vadd.f32 %v988, %v989
        %v991 = vadd.f32 %v924, %v928
        %v992 = vadd.f32 %v991, %v932
        %v993 = vadd.f32 %v992, %v936
        %v994 = vrot.slane %v993, 4
        %v995 = vadd.f32 %v993, %v994
        %v996 = vrot.slane %v995, 2
        %v997 = vadd.f32 %v995, %v996
        %v998 = vrot.slane %v997, 1
        %v999 = vadd.f32 %v997, %v998
        %v1000 = vadd.f32 %v926, %v930
        %v1001 = vadd.f32 %v1000, %v934
        %v1002 = vadd.f32 %v1001, %v938
        %v1003 = vrot.slane %v1002, 4
        %v1004 = vadd.f32 %v1002, %v1003
        %v1005 = vrot.slane %v1004, 2
        %v1006 = vadd.f32 %v1004, %v1005
        %v1007 = vrot.slane %v1006, 1
        %v1008 = vadd.f32 %v1006, %v1007
        %v1009 = vadd.f32 %v940, %v944
        %v1010 = vadd.f32 %v1009, %v948
        %v1011 = vadd.f32 %v1010, %v952
        %v1012 = vrot.slane %v1011, 4
        %v1013 = vadd.f32 %v1011, %v1012
        %v1014 = vrot.slane %v1013, 2
        %v1015 = vadd.f32 %v1013, %v1014
        %v1016 = vrot.slane %v1015, 1
        %v1017 = vadd.f32 %v1015, %v1016
        %v1018 = vadd.f32 %v942, %v946
        %v1019 = vadd.f32 %v1018, %v950
        %v1020 = vadd.f32 %v1019, %v954
        %v1021 = vrot.slane %v1020, 4
        %v1022 = vadd.f32 %v1020, %v1021
        %v1023 = vrot.slane %v1022, 2
        %v1024 = vadd.f32 %v1022, %v1023
        %v1025 = vrot.slane %v1024, 1
        %v1026 = vadd.f32 %v1024, %v1025
        %v1027 = vrcp.pop %v963
        %v1028 = vmul.f32 %v963, %v1027
        %v1029 = vsub.f32 1.0, %v1028
        %v1030 = vmul.f32 %v1027, %v1029
        %v1031 = vadd.f32 %v1027, %v1030
        %vm1032 = vweird.f32 %v963
        %vm1033 = vweird.f32 %v1027
        %vm1034 = vmor %vm1032, %vm1033
        %v1035 = vsel %vm1034, %v1027, %v1031
        %v1036 = vand.u32 2147483647, %v963
        %vm1037 = vcmp.eq.f32.partialorder %v1036, 8.507059e+37
        %v1038 = vand.u32 %v963, 2147483648
        %v1039 = vor.u32 1.1754944e-38, %v1038
        %v1040 = vsel %vm1037, %v1039, %v1035
        %v1041 = vrcp.pop %v972
        %v1042 = vmul.f32 %v972, %v1041
        %v1043 = vsub.f32 1.0, %v1042
        %v1044 = vmul.f32 %v1041, %v1043
        %v1045 = vadd.f32 %v1041, %v1044
        %vm1046 = vweird.f32 %v972
        %vm1047 = vweird.f32 %v1041
        %vm1048 = vmor %vm1046, %vm1047
        %v1049 = vsel %vm1048, %v1041, %v1045
        %v1050 = vand.u32 2147483647, %v972
        %vm1051 = vcmp.eq.f32.partialorder %v1050, 8.507059e+37
        %v1052 = vand.u32 %v972, 2147483648
        %v1053 = vor.u32 1.1754944e-38, %v1052
        %v1054 = vsel %vm1051, %v1053, %v1049
        %v1055 = vrcp.pop %v981
        %v1056 = vmul.f32 %v981, %v1055
        %v1057 = vsub.f32 1.0, %v1056
        %v1058 = vmul.f32 %v1055, %v1057
        %v1059 = vadd.f32 %v1055, %v1058
        %vm1060 = vweird.f32 %v981
        %vm1061 = vweird.f32 %v1055
        %vm1062 = vmor %vm1060, %vm1061
        %v1063 = vsel %vm1062, %v1055, %v1059
        %v1064 = vand.u32 2147483647, %v981
        %vm1065 = vcmp.eq.f32.partialorder %v1064, 8.507059e+37
        %v1066 = vand.u32 %v981, 2147483648
        %v1067 = vor.u32 1.1754944e-38, %v1066
        %v1068 = vsel %vm1065, %v1067, %v1063
        %v1069 = vrcp.pop %v990
        %v1070 = vmul.f32 %v990, %v1069
        %v1071 = vsub.f32 1.0, %v1070
        %v1072 = vmul.f32 %v1069, %v1071
        %v1073 = vadd.f32 %v1069, %v1072
        %vm1074 = vweird.f32 %v990
        %vm1075 = vweird.f32 %v1069
        %vm1076 = vmor %vm1074, %vm1075
        %v1077 = vsel %vm1076, %v1069, %v1073
        %v1078 = vand.u32 2147483647, %v990
        %vm1079 = vcmp.eq.f32.partialorder %v1078, 8.507059e+37
        %v1080 = vand.u32 %v990, 2147483648
        %v1081 = vor.u32 1.1754944e-38, %v1080
        %v1082 = vsel %vm1079, %v1081, %v1077
        %v1083 = vrcp.pop %v999
        %v1084 = vmul.f32 %v999, %v1083
        %v1085 = vsub.f32 1.0, %v1084
        %v1086 = vmul.f32 %v1083, %v1085
        %v1087 = vadd.f32 %v1083, %v1086
        %vm1088 = vweird.f32 %v999
        %vm1089 = vweird.f32 %v1083
        %vm1090 = vmor %vm1088, %vm1089
        %v1091 = vsel %vm1090, %v1083, %v1087
        %v1092 = vand.u32 2147483647, %v999
        %vm1093 = vcmp.eq.f32.partialorder %v1092, 8.507059e+37
        %v1094 = vand.u32 %v999, 2147483648
        %v1095 = vor.u32 1.1754944e-38, %v1094
        %v1096 = vsel %vm1093, %v1095, %v1091
        %v1097 = vrcp.pop %v1008
        %v1098 = vmul.f32 %v1008, %v1097
        %v1099 = vsub.f32 1.0, %v1098
        %v1100 = vmul.f32 %v1097, %v1099
        %v1101 = vadd.f32 %v1097, %v1100
        %vm1102 = vweird.f32 %v1008
        %vm1103 = vweird.f32 %v1097
        %vm1104 = vmor %vm1102, %vm1103
        %v1105 = vsel %vm1104, %v1097, %v1101
        %v1106 = vand.u32 2147483647, %v1008
        %vm1107 = vcmp.eq.f32.partialorder %v1106, 8.507059e+37
        %v1108 = vand.u32 %v1008, 2147483648
        %v1109 = vor.u32 1.1754944e-38, %v1108
        %v1110 = vsel %vm1107, %v1109, %v1105
        %v1111 = vrcp.pop %v1017
        %v1112 = vmul.f32 %v1017, %v1111
        %v1113 = vsub.f32 1.0, %v1112
        %v1114 = vmul.f32 %v1111, %v1113
        %v1115 = vadd.f32 %v1111, %v1114
        %vm1116 = vweird.f32 %v1017
        %vm1117 = vweird.f32 %v1111
        %vm1118 = vmor %vm1116, %vm1117
        %v1119 = vsel %vm1118, %v1111, %v1115
        %v1120 = vand.u32 2147483647, %v1017
        %vm1121 = vcmp.eq.f32.partialorder %v1120, 8.507059e+37
        %v1122 = vand.u32 %v1017, 2147483648
        %v1123 = vor.u32 1.1754944e-38, %v1122
        %v1124 = vsel %vm1121, %v1123, %v1119
        %v1125 = vrcp.pop %v1026
        %v1126 = vmul.f32 %v1026, %v1125
        %v1127 = vsub.f32 1.0, %v1126
        %v1128 = vmul.f32 %v1125, %v1127
        %v1129 = vadd.f32 %v1125, %v1128
        %vm1130 = vweird.f32 %v1026
        %vm1131 = vweird.f32 %v1125
        %vm1132 = vmor %vm1130, %vm1131
        %v1133 = vsel %vm1132, %v1125, %v1129
        %v1134 = vand.u32 2147483647, %v1026
        %vm1135 = vcmp.eq.f32.partialorder %v1134, 8.507059e+37
        %v1136 = vand.u32 %v1026, 2147483648
        %v1137 = vor.u32 1.1754944e-38, %v1136
        %v1138 = vsel %vm1135, %v1137, %v1133
        %v1139 = vmul.f32 %v892, %v1040
        %v1140 = vmul.f32 %v894, %v1054
        %v1141 = vmul.f32 %v896, %v1040
        %v1142 = vmul.f32 %v898, %v1054
        %v1143 = vmul.f32 %v900, %v1040
        %v1144 = vmul.f32 %v902, %v1054
        %v1145 = vmul.f32 %v904, %v1040
        %v1146 = vmul.f32 %v906, %v1054
        %v1147 = vmul.f32 %v908, %v1068
        %v1148 = vmul.f32 %v910, %v1082
        %v1149 = vmul.f32 %v912, %v1068
        %v1150 = vmul.f32 %v914, %v1082
        %v1151 = vmul.f32 %v916, %v1068
        %v1152 = vmul.f32 %v918, %v1082
        %v1153 = vmul.f32 %v920, %v1068
        %v1154 = vmul.f32 %v922, %v1082
        %v1155 = vmul.f32 %v924, %v1096
        %v1156 = vmul.f32 %v926, %v1110
        %v1157 = vmul.f32 %v928, %v1096
        %v1158 = vmul.f32 %v930, %v1110
        %v1159 = vmul.f32 %v932, %v1096
        %v1160 = vmul.f32 %v934, %v1110
        %v1161 = vmul.f32 %v936, %v1096
        %v1162 = vmul.f32 %v938, %v1110
        %v1163 = vmul.f32 %v940, %v1124
        %v1164 = vmul.f32 %v942, %v1138
        %v1165 = vmul.f32 %v944, %v1124
        %v1166 = vmul.f32 %v946, %v1138
        %v1167 = vmul.f32 %v948, %v1124
        %v1168 = vmul.f32 %v950, %v1138
        %v1169 = vmul.f32 %v952, %v1124
        %v1170 = vmul.f32 %v954, %v1138
        %v1171 = vmul.f32 %v1139, 0.17677669
        %v1172 = vmul.f32 %v1140, 0.17677669
        %v1173 = vmul.f32 %v1141, 0.17677669
        %v1174 = vmul.f32 %v1142, 0.17677669
        %v1175 = vmul.f32 %v1143, 0.17677669
        %v1176 = vmul.f32 %v1144, 0.17677669
        %v1177 = vmul.f32 %v1145, 0.17677669
        %v1178 = vmul.f32 %v1146, 0.17677669
        %v1179 = vmul.f32 %v1147, 0.17677669
        %v1180 = vmul.f32 %v1148, 0.17677669
        %v1181 = vmul.f32 %v1149, 0.17677669
        %v1182 = vmul.f32 %v1150, 0.17677669
        %v1183 = vmul.f32 %v1151, 0.17677669
        %v1184 = vmul.f32 %v1152, 0.17677669
        %v1185 = vmul.f32 %v1153, 0.17677669
        %v1186 = vmul.f32 %v1154, 0.17677669
        %v1187 = vmul.f32 %v1155, 0.17677669
        %v1188 = vmul.f32 %v1156, 0.17677669
        %v1189 = vmul.f32 %v1157, 0.17677669
        %v1190 = vmul.f32 %v1158, 0.17677669
        %v1191 = vmul.f32 %v1159, 0.17677669
        %v1192 = vmul.f32 %v1160, 0.17677669
        %v1193 = vmul.f32 %v1161, 0.17677669
        %v1194 = vmul.f32 %v1162, 0.17677669
        %v1195 = vmul.f32 %v1163, 0.17677669
        %v1196 = vmul.f32 %v1164, 0.17677669
        %v1197 = vmul.f32 %v1165, 0.17677669
        %v1198 = vmul.f32 %v1166, 0.17677669
        %v1199 = vmul.f32 %v1167, 0.17677669
        %v1200 = vmul.f32 %v1168, 0.17677669
        %v1201 = vmul.f32 %v1169, 0.17677669
        %v1202 = vmul.f32 %v1170, 0.17677669
        %v1203 = vld [vmem:[%s4] sm:$0xff]
        %v1204 = vld [vmem:[%s4 + $0x10] sm:$0xff]
        %v1205 = vld [vmem:[%s4 + $0x20] sm:$0xff]
        %v1206 = vld [vmem:[%s4 + $0x30] sm:$0xff]
        %v1207 = vld [vmem:[%s4 + $0x40] sm:$0xff]
        %v1208 = vld [vmem:[%s4 + $0x50] sm:$0xff]
        %v1209 = vld [vmem:[%s4 + $0x60] sm:$0xff]
        %v1210 = vld [vmem:[%s4 + $0x70] sm:$0xff]
        %v1211 = vld [vmem:[%s4 + $0x80] sm:$0xff]
        %v1212 = vld [vmem:[%s4 + $0x90] sm:$0xff]
        %v1213 = vld [vmem:[%s4 + $0xa0] sm:$0xff]
        %v1214 = vld [vmem:[%s4 + $0xb0] sm:$0xff]
        %v1215 = vld [vmem:[%s4 + $0xc0] sm:$0xff]
        %v1216 = vld [vmem:[%s4 + $0xd0] sm:$0xff]
        %v1217 = vld [vmem:[%s4 + $0xe0] sm:$0xff]
        %v1218 = vld [vmem:[%s4 + $0xf0] sm:$0xff]
        %v1219 = vld [vmem:[%s4 + $0x108] sm:$0xff]
        %v1220 = vld [vmem:[%s4 + $0x118] sm:$0xff]
        %v1221 = vld [vmem:[%s4 + $0x128] sm:$0xff]
        %v1222 = vld [vmem:[%s4 + $0x138] sm:$0xff]
        %v1223 = vld [vmem:[%s4 + $0x148] sm:$0xff]
        %v1224 = vld [vmem:[%s4 + $0x158] sm:$0xff]
        %v1225 = vld [vmem:[%s4 + $0x168] sm:$0xff]
        %v1226 = vld [vmem:[%s4 + $0x178] sm:$0xff]
        %v1227 = vld [vmem:[%s4 + $0x188] sm:$0xff]
        %v1228 = vld [vmem:[%s4 + $0x198] sm:$0xff]
        %v1229 = vld [vmem:[%s4 + $0x1a8] sm:$0xff]
        %v1230 = vld [vmem:[%s4 + $0x1b8] sm:$0xff]
        %v1231 = vld [vmem:[%s4 + $0x1c8] sm:$0xff]
        %v1232 = vld [vmem:[%s4 + $0x1d8] sm:$0xff]
        %v1233 = vld [vmem:[%s4 + $0x1e8] sm:$0xff]
        %v1234 = vld [vmem:[%s4 + $0x1f8] sm:$0xff]
        %v1235 = vld [vmem:[#allocation5] sm:$0xff]
        %v1236 = vld [vmem:[#allocation5 + $0x8] sm:$0xff]
        %v1237 = vld [vmem:[#allocation5 + $0x10] sm:$0xff]
        %v1238 = vld [vmem:[#allocation5 + $0x18] sm:$0xff]
        %v1239 = vld [vmem:[%s3] sm:$0xff]
        %v1240 = vld [vmem:[%s3 + $0x8] sm:$0xff]
        %v1241 = vld [vmem:[%s3 + $0x10] sm:$0xff]
        %v1242 = vld [vmem:[%s3 + $0x18] sm:$0xff]
        %v1243 = vmul.f32 %v1239, 5.656854
        %v1244 = vmul.f32 %v1240, 5.656854
        %v1245 = vmul.f32 %v1241, 5.656854
        %v1246 = vmul.f32 %v1242, 5.656854
        %1247 = vmax.xlane.f32.xlu0 %v531
        %v1248 = vpop.xlane.xlu0 %1247
        %1249 = vmax.xlane.f32.xlu0 %v534
        %v1250 = vpop.xlane.xlu0 %1249
        %1251 = vmax.xlane.f32.xlu0 %v537
        %v1252 = vpop.xlane.xlu0 %1251
        %1253 = vmax.xlane.f32.xlu0 %v540
        %v1254 = vpop.xlane.xlu0 %1253
        %1255 = vmax.xlane.f32.xlu0 %v543
        %v1256 = vpop.xlane.xlu0 %1255
        %1257 = vmax.xlane.f32.xlu0 %v546
        %v1258 = vpop.xlane.xlu0 %1257
        %1259 = vmax.xlane.f32.xlu0 %v549
        %v1260 = vpop.xlane.xlu0 %1259
        %1261 = vmax.xlane.f32.xlu0 %v552
        %v1262 = vpop.xlane.xlu0 %1261
        %1263 = vmax.xlane.f32.xlu0 %v555
        %v1264 = vpop.xlane.xlu0 %1263
        %1265 = vmax.xlane.f32.xlu0 %v558
        %v1266 = vpop.xlane.xlu0 %1265
        %1267 = vmax.xlane.f32.xlu0 %v561
        %v1268 = vpop.xlane.xlu0 %1267
        %1269 = vmax.xlane.f32.xlu0 %v564
        %v1270 = vpop.xlane.xlu0 %1269
        %1271 = vmax.xlane.f32.xlu0 %v567
        %v1272 = vpop.xlane.xlu0 %1271
        %1273 = vmax.xlane.f32.xlu0 %v570
        %v1274 = vpop.xlane.xlu0 %1273
        %1275 = vmax.xlane.f32.xlu0 %v573
        %v1276 = vpop.xlane.xlu0 %1275
        %1277 = vmax.xlane.f32.xlu0 %v576
        %v1278 = vpop.xlane.xlu0 %1277
        %v1279 = vsub.f32 %v531, %v1248
        %v1280 = vsub.f32 %v534, %v1250
        %v1281 = vsub.f32 %v537, %v1252
        %v1282 = vsub.f32 %v540, %v1254
        %v1283 = vsub.f32 %v543, %v1256
        %v1284 = vsub.f32 %v546, %v1258
        %v1285 = vsub.f32 %v549, %v1260
        %v1286 = vsub.f32 %v552, %v1262
        %v1287 = vsub.f32 %v555, %v1264
        %v1288 = vsub.f32 %v558, %v1266
        %v1289 = vsub.f32 %v561, %v1268
        %v1290 = vsub.f32 %v564, %v1270
        %v1291 = vsub.f32 %v567, %v1272
        %v1292 = vsub.f32 %v570, %v1274
        %v1293 = vsub.f32 %v573, %v1276
        %v1294 = vsub.f32 %v576, %v1278
        %v1295 = vmul.f32 %v1279, 1.442695
        %v1296 = vpow.pop %v1295
        %v1297 = vmul.f32 %v1280, 1.442695
        %v1298 = vpow.pop %v1297
        %v1299 = vmul.f32 %v1281, 1.442695
        %v1300 = vpow.pop %v1299
        %v1301 = vmul.f32 %v1282, 1.442695
        %v1302 = vpow.pop %v1301
        %v1303 = vmul.f32 %v1283, 1.442695
        %v1304 = vpow.pop %v1303
        %v1305 = vmul.f32 %v1284, 1.442695
        %v1306 = vpow.pop %v1305
        %v1307 = vmul.f32 %v1285, 1.442695
        %v1308 = vpow.pop %v1307
        %v1309 = vmul.f32 %v1286, 1.442695
        %v1310 = vpow.pop %v1309
        %v1311 = vmul.f32 %v1287, 1.442695
        %v1312 = vpow.pop %v1311
        %v1313 = vmul.f32 %v1288, 1.442695
        %v1314 = vpow.pop %v1313
        %v1315 = vmul.f32 %v1289, 1.442695
        %v1316 = vpow.pop %v1315
        %v1317 = vmul.f32 %v1290, 1.442695
        %v1318 = vpow.pop %v1317
        %v1319 = vmul.f32 %v1291, 1.442695
        %v1320 = vpow.pop %v1319
        %v1321 = vmul.f32 %v1292, 1.442695
        %v1322 = vpow.pop %v1321
        %v1323 = vmul.f32 %v1293, 1.442695
        %v1324 = vpow.pop %v1323
        %v1325 = vmul.f32 %v1294, 1.442695
        %v1326 = vpow.pop %v1325
        %1327 = vadd.xlane.f32.xlu0 %v1296
        %v1328 = vpop.xlane.xlu0 %1327
        %1329 = vadd.xlane.f32.xlu0 %v1298
        %v1330 = vpop.xlane.xlu0 %1329
        %1331 = vadd.xlane.f32.xlu0 %v1300
        %v1332 = vpop.xlane.xlu0 %1331
        %1333 = vadd.xlane.f32.xlu0 %v1302
        %v1334 = vpop.xlane.xlu0 %1333
        %1335 = vadd.xlane.f32.xlu0 %v1304
        %v1336 = vpop.xlane.xlu0 %1335
        %1337 = vadd.xlane.f32.xlu0 %v1306
        %v1338 = vpop.xlane.xlu0 %1337
        %1339 = vadd.xlane.f32.xlu0 %v1308
        %v1340 = vpop.xlane.xlu0 %1339
        %1341 = vadd.xlane.f32.xlu0 %v1310
        %v1342 = vpop.xlane.xlu0 %1341
        %1343 = vadd.xlane.f32.xlu0 %v1312
        %v1344 = vpop.xlane.xlu0 %1343
        %1345 = vadd.xlane.f32.xlu0 %v1314
        %v1346 = vpop.xlane.xlu0 %1345
        %1347 = vadd.xlane.f32.xlu0 %v1316
        %v1348 = vpop.xlane.xlu0 %1347
        %1349 = vadd.xlane.f32.xlu0 %v1318
        %v1350 = vpop.xlane.xlu0 %1349
        %1351 = vadd.xlane.f32.xlu0 %v1320
        %v1352 = vpop.xlane.xlu0 %1351
        %1353 = vadd.xlane.f32.xlu0 %v1322
        %v1354 = vpop.xlane.xlu0 %1353
        %1355 = vadd.xlane.f32.xlu0 %v1324
        %v1356 = vpop.xlane.xlu0 %1355
        %1357 = vadd.xlane.f32.xlu0 %v1326
        %v1358 = vpop.xlane.xlu0 %1357
        %v1359 = vrcp.pop %v1328
        %v1360 = vmul.f32 %v1328, %v1359
        %v1361 = vsub.f32 1.0, %v1360
        %v1362 = vmul.f32 %v1359, %v1361
        %v1363 = vadd.f32 %v1359, %v1362
        %vm1364 = vweird.f32 %v1328
        %vm1365 = vweird.f32 %v1359
        %vm1366 = vmor %vm1364, %vm1365
        %v1367 = vsel %vm1366, %v1359, %v1363
        %v1368 = vand.u32 2147483647, %v1328
        %vm1369 = vcmp.eq.f32.partialorder %v1368, 8.507059e+37
        %v1370 = vand.u32 %v1328, 2147483648
        %v1371 = vor.u32 1.1754944e-38, %v1370
        %v1372 = vsel %vm1369, %v1371, %v1367
        %v1373 = vrcp.pop %v1330
        %v1374 = vmul.f32 %v1330, %v1373
        %v1375 = vsub.f32 1.0, %v1374
        %v1376 = vmul.f32 %v1373, %v1375
        %v1377 = vadd.f32 %v1373, %v1376
        %vm1378 = vweird.f32 %v1330
        %vm1379 = vweird.f32 %v1373
        %vm1380 = vmor %vm1378, %vm1379
        %v1381 = vsel %vm1380, %v1373, %v1377
        %v1382 = vand.u32 2147483647, %v1330
        %vm1383 = vcmp.eq.f32.partialorder %v1382, 8.507059e+37
        %v1384 = vand.u32 %v1330, 2147483648
        %v1385 = vor.u32 1.1754944e-38, %v1384
        %v1386 = vsel %vm1383, %v1385, %v1381
        %v1387 = vrcp.pop %v1332
        %v1388 = vmul.f32 %v1332, %v1387
        %v1389 = vsub.f32 1.0, %v1388
        %v1390 = vmul.f32 %v1387, %v1389
        %v1391 = vadd.f32 %v1387, %v1390
        %vm1392 = vweird.f32 %v1332
        %vm1393 = vweird.f32 %v1387
        %vm1394 = vmor %vm1392, %vm1393
        %v1395 = vsel %vm1394, %v1387, %v1391
        %v1396 = vand.u32 2147483647, %v1332
        %vm1397 = vcmp.eq.f32.partialorder %v1396, 8.507059e+37
        %v1398 = vand.u32 %v1332, 2147483648
        %v1399 = vor.u32 1.1754944e-38, %v1398
        %v1400 = vsel %vm1397, %v1399, %v1395
        %v1401 = vrcp.pop %v1334
        %v1402 = vmul.f32 %v1334, %v1401
        %v1403 = vsub.f32 1.0, %v1402
        %v1404 = vmul.f32 %v1401, %v1403
        %v1405 = vadd.f32 %v1401, %v1404
        %vm1406 = vweird.f32 %v1334
        %vm1407 = vweird.f32 %v1401
        %vm1408 = vmor %vm1406, %vm1407
        %v1409 = vsel %vm1408, %v1401, %v1405
        %v1410 = vand.u32 2147483647, %v1334
        %vm1411 = vcmp.eq.f32.partialorder %v1410, 8.507059e+37
        %v1412 = vand.u32 %v1334, 2147483648
        %v1413 = vor.u32 1.1754944e-38, %v1412
        %v1414 = vsel %vm1411, %v1413, %v1409
        %v1415 = vrcp.pop %v1336
        %v1416 = vmul.f32 %v1336, %v1415
        %v1417 = vsub.f32 1.0, %v1416
        %v1418 = vmul.f32 %v1415, %v1417
        %v1419 = vadd.f32 %v1415, %v1418
        %vm1420 = vweird.f32 %v1336
        %vm1421 = vweird.f32 %v1415
        %vm1422 = vmor %vm1420, %vm1421
        %v1423 = vsel %vm1422, %v1415, %v1419
        %v1424 = vand.u32 2147483647, %v1336
        %vm1425 = vcmp.eq.f32.partialorder %v1424, 8.507059e+37
        %v1426 = vand.u32 %v1336, 2147483648
        %v1427 = vor.u32 1.1754944e-38, %v1426
        %v1428 = vsel %vm1425, %v1427, %v1423
        %v1429 = vrcp.pop %v1338
        %v1430 = vmul.f32 %v1338, %v1429
        %v1431 = vsub.f32 1.0, %v1430
        %v1432 = vmul.f32 %v1429, %v1431
        %v1433 = vadd.f32 %v1429, %v1432
        %vm1434 = vweird.f32 %v1338
        %vm1435 = vweird.f32 %v1429
        %vm1436 = vmor %vm1434, %vm1435
        %v1437 = vsel %vm1436, %v1429, %v1433
        %v1438 = vand.u32 2147483647, %v1338
        %vm1439 = vcmp.eq.f32.partialorder %v1438, 8.507059e+37
        %v1440 = vand.u32 %v1338, 2147483648
        %v1441 = vor.u32 1.1754944e-38, %v1440
        %v1442 = vsel %vm1439, %v1441, %v1437
        %v1443 = vrcp.pop %v1340
        %v1444 = vmul.f32 %v1340, %v1443
        %v1445 = vsub.f32 1.0, %v1444
        %v1446 = vmul.f32 %v1443, %v1445
        %v1447 = vadd.f32 %v1443, %v1446
        %vm1448 = vweird.f32 %v1340
        %vm1449 = vweird.f32 %v1443
        %vm1450 = vmor %vm1448, %vm1449
        %v1451 = vsel %vm1450, %v1443, %v1447
        %v1452 = vand.u32 2147483647, %v1340
        %vm1453 = vcmp.eq.f32.partialorder %v1452, 8.507059e+37
        %v1454 = vand.u32 %v1340, 2147483648
        %v1455 = vor.u32 1.1754944e-38, %v1454
        %v1456 = vsel %vm1453, %v1455, %v1451
        %v1457 = vrcp.pop %v1342
        %v1458 = vmul.f32 %v1342, %v1457
        %v1459 = vsub.f32 1.0, %v1458
        %v1460 = vmul.f32 %v1457, %v1459
        %v1461 = vadd.f32 %v1457, %v1460
        %vm1462 = vweird.f32 %v1342
        %vm1463 = vweird.f32 %v1457
        %vm1464 = vmor %vm1462, %vm1463
        %v1465 = vsel %vm1464, %v1457, %v1461
        %v1466 = vand.u32 2147483647, %v1342
        %vm1467 = vcmp.eq.f32.partialorder %v1466, 8.507059e+37
        %v1468 = vand.u32 %v1342, 2147483648
        %v1469 = vor.u32 1.1754944e-38, %v1468
        %v1470 = vsel %vm1467, %v1469, %v1465
        %v1471 = vrcp.pop %v1344
        %v1472 = vmul.f32 %v1344, %v1471
        %v1473 = vsub.f32 1.0, %v1472
        %v1474 = vmul.f32 %v1471, %v1473
        %v1475 = vadd.f32 %v1471, %v1474
        %vm1476 = vweird.f32 %v1344
        %vm1477 = vweird.f32 %v1471
        %vm1478 = vmor %vm1476, %vm1477
        %v1479 = vsel %vm1478, %v1471, %v1475
        %v1480 = vand.u32 2147483647, %v1344
        %vm1481 = vcmp.eq.f32.partialorder %v1480, 8.507059e+37
        %v1482 = vand.u32 %v1344, 2147483648
        %v1483 = vor.u32 1.1754944e-38, %v1482
        %v1484 = vsel %vm1481, %v1483, %v1479
        %v1485 = vrcp.pop %v1346
        %v1486 = vmul.f32 %v1346, %v1485
        %v1487 = vsub.f32 1.0, %v1486
        %v1488 = vmul.f32 %v1485, %v1487
        %v1489 = vadd.f32 %v1485, %v1488
        %vm1490 = vweird.f32 %v1346
        %vm1491 = vweird.f32 %v1485
        %vm1492 = vmor %vm1490, %vm1491
        %v1493 = vsel %vm1492, %v1485, %v1489
        %v1494 = vand.u32 2147483647, %v1346
        %vm1495 = vcmp.eq.f32.partialorder %v1494, 8.507059e+37
        %v1496 = vand.u32 %v1346, 2147483648
        %v1497 = vor.u32 1.1754944e-38, %v1496
        %v1498 = vsel %vm1495, %v1497, %v1493
        %v1499 = vrcp.pop %v1348
        %v1500 = vmul.f32 %v1348, %v1499
        %v1501 = vsub.f32 1.0, %v1500
        %v1502 = vmul.f32 %v1499, %v1501
        %v1503 = vadd.f32 %v1499, %v1502
        %vm1504 = vweird.f32 %v1348
        %vm1505 = vweird.f32 %v1499
        %vm1506 = vmor %vm1504, %vm1505
        %v1507 = vsel %vm1506, %v1499, %v1503
        %v1508 = vand.u32 2147483647, %v1348
        %vm1509 = vcmp.eq.f32.partialorder %v1508, 8.507059e+37
        %v1510 = vand.u32 %v1348, 2147483648
        %v1511 = vor.u32 1.1754944e-38, %v1510
        %v1512 = vsel %vm1509, %v1511, %v1507
        %v1513 = vrcp.pop %v1350
        %v1514 = vmul.f32 %v1350, %v1513
        %v1515 = vsub.f32 1.0, %v1514
        %v1516 = vmul.f32 %v1513, %v1515
        %v1517 = vadd.f32 %v1513, %v1516
        %vm1518 = vweird.f32 %v1350
        %vm1519 = vweird.f32 %v1513
        %vm1520 = vmor %vm1518, %vm1519
        %v1521 = vsel %vm1520, %v1513, %v1517
        %v1522 = vand.u32 2147483647, %v1350
        %vm1523 = vcmp.eq.f32.partialorder %v1522, 8.507059e+37
        %v1524 = vand.u32 %v1350, 2147483648
        %v1525 = vor.u32 1.1754944e-38, %v1524
        %v1526 = vsel %vm1523, %v1525, %v1521
        %v1527 = vrcp.pop %v1352
        %v1528 = vmul.f32 %v1352, %v1527
        %v1529 = vsub.f32 1.0, %v1528
        %v1530 = vmul.f32 %v1527, %v1529
        %v1531 = vadd.f32 %v1527, %v1530
        %vm1532 = vweird.f32 %v1352
        %vm1533 = vweird.f32 %v1527
        %vm1534 = vmor %vm1532, %vm1533
        %v1535 = vsel %vm1534, %v1527, %v1531
        %v1536 = vand.u32 2147483647, %v1352
        %vm1537 = vcmp.eq.f32.partialorder %v1536, 8.507059e+37
        %v1538 = vand.u32 %v1352, 2147483648
        %v1539 = vor.u32 1.1754944e-38, %v1538
        %v1540 = vsel %vm1537, %v1539, %v1535
        %v1541 = vrcp.pop %v1354
        %v1542 = vmul.f32 %v1354, %v1541
        %v1543 = vsub.f32 1.0, %v1542
        %v1544 = vmul.f32 %v1541, %v1543
        %v1545 = vadd.f32 %v1541, %v1544
        %vm1546 = vweird.f32 %v1354
        %vm1547 = vweird.f32 %v1541
        %vm1548 = vmor %vm1546, %vm1547
        %v1549 = vsel %vm1548, %v1541, %v1545
        %v1550 = vand.u32 2147483647, %v1354
        %vm1551 = vcmp.eq.f32.partialorder %v1550, 8.507059e+37
        %v1552 = vand.u32 %v1354, 2147483648
        %v1553 = vor.u32 1.1754944e-38, %v1552
        %v1554 = vsel %vm1551, %v1553, %v1549
        %v1555 = vrcp.pop %v1356
        %v1556 = vmul.f32 %v1356, %v1555
        %v1557 = vsub.f32 1.0, %v1556
        %v1558 = vmul.f32 %v1555, %v1557
        %v1559 = vadd.f32 %v1555, %v1558
        %vm1560 = vweird.f32 %v1356
        %vm1561 = vweird.f32 %v1555
        %vm1562 = vmor %vm1560, %vm1561
        %v1563 = vsel %vm1562, %v1555, %v1559
        %v1564 = vand.u32 2147483647, %v1356
        %vm1565 = vcmp.eq.f32.partialorder %v1564, 8.507059e+37
        %v1566 = vand.u32 %v1356, 2147483648
        %v1567 = vor.u32 1.1754944e-38, %v1566
        %v1568 = vsel %vm1565, %v1567, %v1563
        %v1569 = vrcp.pop %v1358
        %v1570 = vmul.f32 %v1358, %v1569
        %v1571 = vsub.f32 1.0, %v1570
        %v1572 = vmul.f32 %v1569, %v1571
        %v1573 = vadd.f32 %v1569, %v1572
        %vm1574 = vweird.f32 %v1358
        %vm1575 = vweird.f32 %v1569
        %vm1576 = vmor %vm1574, %vm1575
        %v1577 = vsel %vm1576, %v1569, %v1573
        %v1578 = vand.u32 2147483647, %v1358
        %vm1579 = vcmp.eq.f32.partialorder %v1578, 8.507059e+37
        %v1580 = vand.u32 %v1358, 2147483648
        %v1581 = vor.u32 1.1754944e-38, %v1580
        %v1582 = vsel %vm1579, %v1581, %v1577
        %v1583 = vmul.f32 %v1296, %v1372
        %v1584 = vmul.f32 %v1298, %v1386
        %v1585 = vmul.f32 %v1300, %v1400
        %v1586 = vmul.f32 %v1302, %v1414
        %v1587 = vmul.f32 %v1304, %v1428
        %v1588 = vmul.f32 %v1306, %v1442
        %v1589 = vmul.f32 %v1308, %v1456
        %v1590 = vmul.f32 %v1310, %v1470
        %v1591 = vmul.f32 %v1312, %v1484
        %v1592 = vmul.f32 %v1314, %v1498
        %v1593 = vmul.f32 %v1316, %v1512
        %v1594 = vmul.f32 %v1318, %v1526
        %v1595 = vmul.f32 %v1320, %v1540
        %v1596 = vmul.f32 %v1322, %v1554
        %v1597 = vmul.f32 %v1324, %v1568
        %v1598 = vmul.f32 %v1326, %v1582
        %1599 = vmax.xlane.f32.xlu0 %v692
        %v1600 = vpop.xlane.xlu0 %1599
        %1601 = vmax.xlane.f32.xlu0 %v695
        %v1602 = vpop.xlane.xlu0 %1601
        %1603 = vmax.xlane.f32.xlu0 %v698
        %v1604 = vpop.xlane.xlu0 %1603
        %1605 = vmax.xlane.f32.xlu0 %v701
        %v1606 = vpop.xlane.xlu0 %1605
        %1607 = vmax.xlane.f32.xlu0 %v704
        %v1608 = vpop.xlane.xlu0 %1607
        %1609 = vmax.xlane.f32.xlu0 %v707
        %v1610 = vpop.xlane.xlu0 %1609
        %1611 = vmax.xlane.f32.xlu0 %v710
        %v1612 = vpop.xlane.xlu0 %1611
        %1613 = vmax.xlane.f32.xlu0 %v713
        %v1614 = vpop.xlane.xlu0 %1613
        %1615 = vmax.xlane.f32.xlu0 %v716
        %v1616 = vpop.xlane.xlu0 %1615
        %1617 = vmax.xlane.f32.xlu0 %v719
        %v1618 = vpop.xlane.xlu0 %1617
        %1619 = vmax.xlane.f32.xlu0 %v722
        %v1620 = vpop.xlane.xlu0 %1619
        %1621 = vmax.xlane.f32.xlu0 %v725
        %v1622 = vpop.xlane.xlu0 %1621
        %1623 = vmax.xlane.f32.xlu0 %v728
        %v1624 = vpop.xlane.xlu0 %1623
        %1625 = vmax.xlane.f32.xlu0 %v731
        %v1626 = vpop.xlane.xlu0 %1625
        %1627 = vmax.xlane.f32.xlu0 %v734
        %v1628 = vpop.xlane.xlu0 %1627
        %1629 = vmax.xlane.f32.xlu0 %v737
        %v1630 = vpop.xlane.xlu0 %1629
        %v1631 = vsub.f32 %v692, %v1600
        %v1632 = vsub.f32 %v695, %v1602
        %v1633 = vsub.f32 %v698, %v1604
        %v1634 = vsub.f32 %v701, %v1606
        %v1635 = vsub.f32 %v704, %v1608
        %v1636 = vsub.f32 %v707, %v1610
        %v1637 = vsub.f32 %v710, %v1612
        %v1638 = vsub.f32 %v713, %v1614
        %v1639 = vsub.f32 %v716, %v1616
        %v1640 = vsub.f32 %v719, %v1618
        %v1641 = vsub.f32 %v722, %v1620
        %v1642 = vsub.f32 %v725, %v1622
        %v1643 = vsub.f32 %v728, %v1624
        %v1644 = vsub.f32 %v731, %v1626
        %v1645 = vsub.f32 %v734, %v1628
        %v1646 = vsub.f32 %v737, %v1630
        %v1647 = vmul.f32 %v1631, 1.442695
        %v1648 = vpow.pop %v1647
        %v1649 = vmul.f32 %v1632, 1.442695
        %v1650 = vpow.pop %v1649
        %v1651 = vmul.f32 %v1633, 1.442695
        %v1652 = vpow.pop %v1651
        %v1653 = vmul.f32 %v1634, 1.442695
        %v1654 = vpow.pop %v1653
        %v1655 = vmul.f32 %v1635, 1.442695
        %v1656 = vpow.pop %v1655
        %v1657 = vmul.f32 %v1636, 1.442695
        %v1658 = vpow.pop %v1657
        %v1659 = vmul.f32 %v1637, 1.442695
        %v1660 = vpow.pop %v1659
        %v1661 = vmul.f32 %v1638, 1.442695
        %v1662 = vpow.pop %v1661
        %v1663 = vmul.f32 %v1639, 1.442695
        %v1664 = vpow.pop %v1663
        %v1665 = vmul.f32 %v1640, 1.442695
        %v1666 = vpow.pop %v1665
        %v1667 = vmul.f32 %v1641, 1.442695
        %v1668 = vpow.pop %v1667
        %v1669 = vmul.f32 %v1642, 1.442695
        %v1670 = vpow.pop %v1669
        %v1671 = vmul.f32 %v1643, 1.442695
        %v1672 = vpow.pop %v1671
        %v1673 = vmul.f32 %v1644, 1.442695
        %v1674 = vpow.pop %v1673
        %v1675 = vmul.f32 %v1645, 1.442695
        %v1676 = vpow.pop %v1675
        %v1677 = vmul.f32 %v1646, 1.442695
        %v1678 = vpow.pop %v1677
        %1679 = vadd.xlane.f32.xlu0 %v1648
        %v1680 = vpop.xlane.xlu0 %1679
        %1681 = vadd.xlane.f32.xlu0 %v1650
        %v1682 = vpop.xlane.xlu0 %1681
        %1683 = vadd.xlane.f32.xlu0 %v1652
        %v1684 = vpop.xlane.xlu0 %1683
        %1685 = vadd.xlane.f32.xlu0 %v1654
        %v1686 = vpop.xlane.xlu0 %1685
        %1687 = vadd.xlane.f32.xlu0 %v1656
        %v1688 = vpop.xlane.xlu0 %1687
        %1689 = vadd.xlane.f32.xlu0 %v1658
        %v1690 = vpop.xlane.xlu0 %1689
        %1691 = vadd.xlane.f32.xlu0 %v1660
        %v1692 = vpop.xlane.xlu0 %1691
        %1693 = vadd.xlane.f32.xlu0 %v1662
        %v1694 = vpop.xlane.xlu0 %1693
        %1695 = vadd.xlane.f32.xlu0 %v1664
        %v1696 = vpop.xlane.xlu0 %1695
        %1697 = vadd.xlane.f32.xlu0 %v1666
        %v1698 = vpop.xlane.xlu0 %1697
        %1699 = vadd.xlane.f32.xlu0 %v1668
        %v1700 = vpop.xlane.xlu0 %1699
        %1701 = vadd.xlane.f32.xlu0 %v1670
        %v1702 = vpop.xlane.xlu0 %1701
        %1703 = vadd.xlane.f32.xlu0 %v1672
        %v1704 = vpop.xlane.xlu0 %1703
        %1705 = vadd.xlane.f32.xlu0 %v1674
        %v1706 = vpop.xlane.xlu0 %1705
        %1707 = vadd.xlane.f32.xlu0 %v1676
        %v1708 = vpop.xlane.xlu0 %1707
        %1709 = vadd.xlane.f32.xlu0 %v1678
        %v1710 = vpop.xlane.xlu0 %1709
        %v1711 = vrcp.pop %v1680
        %v1712 = vmul.f32 %v1680, %v1711
        %v1713 = vsub.f32 1.0, %v1712
        %v1714 = vmul.f32 %v1711, %v1713
        %v1715 = vadd.f32 %v1711, %v1714
        %vm1716 = vweird.f32 %v1680
        %vm1717 = vweird.f32 %v1711
        %vm1718 = vmor %vm1716, %vm1717
        %v1719 = vsel %vm1718, %v1711, %v1715
        %v1720 = vand.u32 2147483647, %v1680
        %vm1721 = vcmp.eq.f32.partialorder %v1720, 8.507059e+37
        %v1722 = vand.u32 %v1680, 2147483648
        %v1723 = vor.u32 1.1754944e-38, %v1722
        %v1724 = vsel %vm1721, %v1723, %v1719
        %v1725 = vrcp.pop %v1682
        %v1726 = vmul.f32 %v1682, %v1725
        %v1727 = vsub.f32 1.0, %v1726
        %v1728 = vmul.f32 %v1725, %v1727
        %v1729 = vadd.f32 %v1725, %v1728
        %vm1730 = vweird.f32 %v1682
        %vm1731 = vweird.f32 %v1725
        %vm1732 = vmor %vm1730, %vm1731
        %v1733 = vsel %vm1732, %v1725, %v1729
        %v1734 = vand.u32 2147483647, %v1682
        %vm1735 = vcmp.eq.f32.partialorder %v1734, 8.507059e+37
        %v1736 = vand.u32 %v1682, 2147483648
        %v1737 = vor.u32 1.1754944e-38, %v1736
        %v1738 = vsel %vm1735, %v1737, %v1733
        %v1739 = vrcp.pop %v1684
        %v1740 = vmul.f32 %v1684, %v1739
        %v1741 = vsub.f32 1.0, %v1740
        %v1742 = vmul.f32 %v1739, %v1741
        %v1743 = vadd.f32 %v1739, %v1742
        %vm1744 = vweird.f32 %v1684
        %vm1745 = vweird.f32 %v1739
        %vm1746 = vmor %vm1744, %vm1745
        %v1747 = vsel %vm1746, %v1739, %v1743
        %v1748 = vand.u32 2147483647, %v1684
        %vm1749 = vcmp.eq.f32.partialorder %v1748, 8.507059e+37
        %v1750 = vand.u32 %v1684, 2147483648
        %v1751 = vor.u32 1.1754944e-38, %v1750
        %v1752 = vsel %vm1749, %v1751, %v1747
        %v1753 = vrcp.pop %v1686
        %v1754 = vmul.f32 %v1686, %v1753
        %v1755 = vsub.f32 1.0, %v1754
        %v1756 = vmul.f32 %v1753, %v1755
        %v1757 = vadd.f32 %v1753, %v1756
        %vm1758 = vweird.f32 %v1686
        %vm1759 = vweird.f32 %v1753
        %vm1760 = vmor %vm1758, %vm1759
        %v1761 = vsel %vm1760, %v1753, %v1757
        %v1762 = vand.u32 2147483647, %v1686
        %vm1763 = vcmp.eq.f32.partialorder %v1762, 8.507059e+37
        %v1764 = vand.u32 %v1686, 2147483648
        %v1765 = vor.u32 1.1754944e-38, %v1764
        %v1766 = vsel %vm1763, %v1765, %v1761
        %v1767 = vrcp.pop %v1688
        %v1768 = vmul.f32 %v1688, %v1767
        %v1769 = vsub.f32 1.0, %v1768
        %v1770 = vmul.f32 %v1767, %v1769
        %v1771 = vadd.f32 %v1767, %v1770
        %vm1772 = vweird.f32 %v1688
        %vm1773 = vweird.f32 %v1767
        %vm1774 = vmor %vm1772, %vm1773
        %v1775 = vsel %vm1774, %v1767, %v1771
        %v1776 = vand.u32 2147483647, %v1688
        %vm1777 = vcmp.eq.f32.partialorder %v1776, 8.507059e+37
        %v1778 = vand.u32 %v1688, 2147483648
        %v1779 = vor.u32 1.1754944e-38, %v1778
        %v1780 = vsel %vm1777, %v1779, %v1775
        %v1781 = vrcp.pop %v1690
        %v1782 = vmul.f32 %v1690, %v1781
        %v1783 = vsub.f32 1.0, %v1782
        %v1784 = vmul.f32 %v1781, %v1783
        %v1785 = vadd.f32 %v1781, %v1784
        %vm1786 = vweird.f32 %v1690
        %vm1787 = vweird.f32 %v1781
        %vm1788 = vmor %vm1786, %vm1787
        %v1789 = vsel %vm1788, %v1781, %v1785
        %v1790 = vand.u32 2147483647, %v1690
        %vm1791 = vcmp.eq.f32.partialorder %v1790, 8.507059e+37
        %v1792 = vand.u32 %v1690, 2147483648
        %v1793 = vor.u32 1.1754944e-38, %v1792
        %v1794 = vsel %vm1791, %v1793, %v1789
        %v1795 = vrcp.pop %v1692
        %v1796 = vmul.f32 %v1692, %v1795
        %v1797 = vsub.f32 1.0, %v1796
        %v1798 = vmul.f32 %v1795, %v1797
        %v1799 = vadd.f32 %v1795, %v1798
        %vm1800 = vweird.f32 %v1692
        %vm1801 = vweird.f32 %v1795
        %vm1802 = vmor %vm1800, %vm1801
        %v1803 = vsel %vm1802, %v1795, %v1799
        %v1804 = vand.u32 2147483647, %v1692
        %vm1805 = vcmp.eq.f32.partialorder %v1804, 8.507059e+37
        %v1806 = vand.u32 %v1692, 2147483648
        %v1807 = vor.u32 1.1754944e-38, %v1806
        %v1808 = vsel %vm1805, %v1807, %v1803
        %v1809 = vrcp.pop %v1694
        %v1810 = vmul.f32 %v1694, %v1809
        %v1811 = vsub.f32 1.0, %v1810
        %v1812 = vmul.f32 %v1809, %v1811
        %v1813 = vadd.f32 %v1809, %v1812
        %vm1814 = vweird.f32 %v1694
        %vm1815 = vweird.f32 %v1809
        %vm1816 = vmor %vm1814, %vm1815
        %v1817 = vsel %vm1816, %v1809, %v1813
        %v1818 = vand.u32 2147483647, %v1694
        %vm1819 = vcmp.eq.f32.partialorder %v1818, 8.507059e+37
        %v1820 = vand.u32 %v1694, 2147483648
        %v1821 = vor.u32 1.1754944e-38, %v1820
        %v1822 = vsel %vm1819, %v1821, %v1817
        %v1823 = vrcp.pop %v1696
        %v1824 = vmul.f32 %v1696, %v1823
        %v1825 = vsub.f32 1.0, %v1824
        %v1826 = vmul.f32 %v1823, %v1825
        %v1827 = vadd.f32 %v1823, %v1826
        %vm1828 = vweird.f32 %v1696
        %vm1829 = vweird.f32 %v1823
        %vm1830 = vmor %vm1828, %vm1829
        %v1831 = vsel %vm1830, %v1823, %v1827
        %v1832 = vand.u32 2147483647, %v1696
        %vm1833 = vcmp.eq.f32.partialorder %v1832, 8.507059e+37
        %v1834 = vand.u32 %v1696, 2147483648
        %v1835 = vor.u32 1.1754944e-38, %v1834
        %v1836 = vsel %vm1833, %v1835, %v1831
        %v1837 = vrcp.pop %v1698
        %v1838 = vmul.f32 %v1698, %v1837
        %v1839 = vsub.f32 1.0, %v1838
        %v1840 = vmul.f32 %v1837, %v1839
        %v1841 = vadd.f32 %v1837, %v1840
        %vm1842 = vweird.f32 %v1698
        %vm1843 = vweird.f32 %v1837
        %vm1844 = vmor %vm1842, %vm1843
        %v1845 = vsel %vm1844, %v1837, %v1841
        %v1846 = vand.u32 2147483647, %v1698
        %vm1847 = vcmp.eq.f32.partialorder %v1846, 8.507059e+37
        %v1848 = vand.u32 %v1698, 2147483648
        %v1849 = vor.u32 1.1754944e-38, %v1848
        %v1850 = vsel %vm1847, %v1849, %v1845
        %v1851 = vrcp.pop %v1700
        %v1852 = vmul.f32 %v1700, %v1851
        %v1853 = vsub.f32 1.0, %v1852
        %v1854 = vmul.f32 %v1851, %v1853
        %v1855 = vadd.f32 %v1851, %v1854
        %vm1856 = vweird.f32 %v1700
        %vm1857 = vweird.f32 %v1851
        %vm1858 = vmor %vm1856, %vm1857
        %v1859 = vsel %vm1858, %v1851, %v1855
        %v1860 = vand.u32 2147483647, %v1700
        %vm1861 = vcmp.eq.f32.partialorder %v1860, 8.507059e+37
        %v1862 = vand.u32 %v1700, 2147483648
        %v1863 = vor.u32 1.1754944e-38, %v1862
        %v1864 = vsel %vm1861, %v1863, %v1859
        %v1865 = vrcp.pop %v1702
        %v1866 = vmul.f32 %v1702, %v1865
        %v1867 = vsub.f32 1.0, %v1866
        %v1868 = vmul.f32 %v1865, %v1867
        %v1869 = vadd.f32 %v1865, %v1868
        %vm1870 = vweird.f32 %v1702
        %vm1871 = vweird.f32 %v1865
        %vm1872 = vmor %vm1870, %vm1871
        %v1873 = vsel %vm1872, %v1865, %v1869
        %v1874 = vand.u32 2147483647, %v1702
        %vm1875 = vcmp.eq.f32.partialorder %v1874, 8.507059e+37
        %v1876 = vand.u32 %v1702, 2147483648
        %v1877 = vor.u32 1.1754944e-38, %v1876
        %v1878 = vsel %vm1875, %v1877, %v1873
        %v1879 = vrcp.pop %v1704
        %v1880 = vmul.f32 %v1704, %v1879
        %v1881 = vsub.f32 1.0, %v1880
        %v1882 = vmul.f32 %v1879, %v1881
        %v1883 = vadd.f32 %v1879, %v1882
        %vm1884 = vweird.f32 %v1704
        %vm1885 = vweird.f32 %v1879
        %vm1886 = vmor %vm1884, %vm1885
        %v1887 = vsel %vm1886, %v1879, %v1883
        %v1888 = vand.u32 2147483647, %v1704
        %vm1889 = vcmp.eq.f32.partialorder %v1888, 8.507059e+37
        %v1890 = vand.u32 %v1704, 2147483648
        %v1891 = vor.u32 1.1754944e-38, %v1890
        %v1892 = vsel %vm1889, %v1891, %v1887
        %v1893 = vrcp.pop %v1706
        %v1894 = vmul.f32 %v1706, %v1893
        %v1895 = vsub.f32 1.0, %v1894
        %v1896 = vmul.f32 %v1893, %v1895
        %v1897 = vadd.f32 %v1893, %v1896
        %vm1898 = vweird.f32 %v1706
        %vm1899 = vweird.f32 %v1893
        %vm1900 = vmor %vm1898, %vm1899
        %v1901 = vsel %vm1900, %v1893, %v1897
        %v1902 = vand.u32 2147483647, %v1706
        %vm1903 = vcmp.eq.f32.partialorder %v1902, 8.507059e+37
        %v1904 = vand.u32 %v1706, 2147483648
        %v1905 = vor.u32 1.1754944e-38, %v1904
        %v1906 = vsel %vm1903, %v1905, %v1901
        %v1907 = vrcp.pop %v1708
        %v1908 = vmul.f32 %v1708, %v1907
        %v1909 = vsub.f32 1.0, %v1908
        %v1910 = vmul.f32 %v1907, %v1909
        %v1911 = vadd.f32 %v1907, %v1910
        %vm1912 = vweird.f32 %v1708
        %vm1913 = vweird.f32 %v1907
        %vm1914 = vmor %vm1912, %vm1913
        %v1915 = vsel %vm1914, %v1907, %v1911
        %v1916 = vand.u32 2147483647, %v1708
        %vm1917 = vcmp.eq.f32.partialorder %v1916, 8.507059e+37
        %v1918 = vand.u32 %v1708, 2147483648
        %v1919 = vor.u32 1.1754944e-38, %v1918
        %v1920 = vsel %vm1917, %v1919, %v1915
        %v1921 = vrcp.pop %v1710
        %v1922 = vmul.f32 %v1710, %v1921
        %v1923 = vsub.f32 1.0, %v1922
        %v1924 = vmul.f32 %v1921, %v1923
        %v1925 = vadd.f32 %v1921, %v1924
        %vm1926 = vweird.f32 %v1710
        %vm1927 = vweird.f32 %v1921
        %vm1928 = vmor %vm1926, %vm1927
        %v1929 = vsel %vm1928, %v1921, %v1925
        %v1930 = vand.u32 2147483647, %v1710
        %vm1931 = vcmp.eq.f32.partialorder %v1930, 8.507059e+37
        %v1932 = vand.u32 %v1710, 2147483648
        %v1933 = vor.u32 1.1754944e-38, %v1932
        %v1934 = vsel %vm1931, %v1933, %v1929
        %v1935 = vmul.f32 %v1648, %v1724
        %v1936 = vmul.f32 %v1650, %v1738
        %v1937 = vmul.f32 %v1652, %v1752
        %v1938 = vmul.f32 %v1654, %v1766
        %v1939 = vmul.f32 %v1656, %v1780
        %v1940 = vmul.f32 %v1658, %v1794
        %v1941 = vmul.f32 %v1660, %v1808
        %v1942 = vmul.f32 %v1662, %v1822
        %v1943 = vmul.f32 %v1664, %v1836
        %v1944 = vmul.f32 %v1666, %v1850
        %v1945 = vmul.f32 %v1668, %v1864
        %v1946 = vmul.f32 %v1670, %v1878
        %v1947 = vmul.f32 %v1672, %v1892
        %v1948 = vmul.f32 %v1674, %v1906
        %v1949 = vmul.f32 %v1676, %v1920
        %v1950 = vmul.f32 %v1678, %v1934
        %1951 = vmatpush.xpose.msra.mxu0 %v1598
        %1952 = vmatpush.xpose.msra.mxu0 %v1597
        %1953 = vmatpush.xpose.msra.mxu0 %v1596
        %1954 = vmatpush.xpose.msra.mxu0 %v1595
        %1955 = vmatpush.xpose.msra.mxu0 %v1594
        %1956 = vmatpush.xpose.msra.mxu0 %v1593
        %1957 = vmatpush.xpose.msra.mxu0 %v1592
        %1958 = vmatpush.xpose.msra.mxu0 %v1591
        %1959 = vmatpush.xpose.msra.mxu0 %v1590
        %1960 = vmatpush.xpose.msra.mxu0 %v1589
        %1961 = vmatpush.xpose.msra.mxu0 %v1588
        %1962 = vmatpush.xpose.msra.mxu0 %v1587
        %1963 = vmatpush.xpose.msra.mxu0 %v1586
        %1964 = vmatpush.xpose.msra.mxu0 %v1585
        %1965 = vmatpush.xpose.msra.mxu0 %v1584
        %1966 = vmatpush.xpose.msra.mxu0 %v1583
        %1967 = vmatmul.f32.gmra.mxu0 %v579
        %v1968 = vpop.f32.mrf.mxu0
        %v1969 = vadd.f32 0.0, %v1968
        %1970 = vmatmul.f32.gmra.mxu0 %v582
        %v1971 = vpop.f32.mrf.mxu0
        %v1972 = vadd.f32 0.0, %v1971
        %1973 = vmatmul.f32.gmra.mxu0 %v585
        %v1974 = vpop.f32.mrf.mxu0
        %v1975 = vadd.f32 0.0, %v1974
        %1976 = vmatmul.f32.gmra.mxu0 %v588
        %v1977 = vpop.f32.mrf.mxu0
        %v1978 = vadd.f32 0.0, %v1977
        %1979 = vmatmul.f32.gmra.mxu0 %v591
        %v1980 = vpop.f32.mrf.mxu0
        %v1981 = vadd.f32 0.0, %v1980
        %1982 = vmatmul.f32.gmra.mxu0 %v594
        %v1983 = vpop.f32.mrf.mxu0
        %v1984 = vadd.f32 0.0, %v1983
        %1985 = vmatmul.f32.gmra.mxu0 %v597
        %v1986 = vpop.f32.mrf.mxu0
        %v1987 = vadd.f32 0.0, %v1986
        %1988 = vmatmul.f32.gmra.mxu0 %v600
        %v1989 = vpop.f32.mrf.mxu0
        %v1990 = vadd.f32 0.0, %v1989
        %1991 = vmatmul.f32.gmra.mxu0 %v603
        %v1992 = vpop.f32.mrf.mxu0
        %v1993 = vadd.f32 0.0, %v1992
        %1994 = vmatmul.f32.gmra.mxu0 %v606
        %v1995 = vpop.f32.mrf.mxu0
        %v1996 = vadd.f32 0.0, %v1995
        %1997 = vmatmul.f32.gmra.mxu0 %v609
        %v1998 = vpop.f32.mrf.mxu0
        %v1999 = vadd.f32 0.0, %v1998
        %2000 = vmatmul.f32.gmra.mxu0 %v612
        %v2001 = vpop.f32.mrf.mxu0
        %v2002 = vadd.f32 0.0, %v2001
        %2003 = vmatmul.f32.gmra.mxu0 %v615
        %v2004 = vpop.f32.mrf.mxu0
        %v2005 = vadd.f32 0.0, %v2004
        %2006 = vmatmul.f32.gmra.mxu0 %v618
        %v2007 = vpop.f32.mrf.mxu0
        %v2008 = vadd.f32 0.0, %v2007
        %2009 = vmatmul.f32.gmra.mxu0 %v621
        %v2010 = vpop.f32.mrf.mxu0
        %v2011 = vadd.f32 0.0, %v2010
        %2012 = vmatmul.f32.gmra.mxu0 %v624
        %v2013 = vpop.f32.mrf.mxu0
        %v2014 = vadd.f32 0.0, %v2013
        %2015 = vmatmul.f32.gmra.mxu0 %v740
        %v2016 = vpop.f32.mrf.mxu0
        %2017 = vmatmul.f32.gmra.mxu0 %v743
        %v2018 = vpop.f32.mrf.mxu0
        %2019 = vmatmul.f32.gmra.mxu0 %v746
        %v2020 = vpop.f32.mrf.mxu0
        %2021 = vmatmul.f32.gmra.mxu0 %v749
        %v2022 = vpop.f32.mrf.mxu0
        %2023 = vmatmul.f32.gmra.mxu0 %v752
        %v2024 = vpop.f32.mrf.mxu0
        %2025 = vmatmul.f32.gmra.mxu0 %v755
        %v2026 = vpop.f32.mrf.mxu0
        %2027 = vmatmul.f32.gmra.mxu0 %v758
        %v2028 = vpop.f32.mrf.mxu0
        %2029 = vmatmul.f32.gmra.mxu0 %v761
        %v2030 = vpop.f32.mrf.mxu0
        %2031 = vmatmul.f32.gmra.mxu0 %v764
        %v2032 = vpop.f32.mrf.mxu0
        %2033 = vmatmul.f32.gmra.mxu0 %v767
        %v2034 = vpop.f32.mrf.mxu0
        %2035 = vmatmul.f32.gmra.mxu0 %v770
        %v2036 = vpop.f32.mrf.mxu0
        %2037 = vmatmul.f32.gmra.mxu0 %v773
        %v2038 = vpop.f32.mrf.mxu0
        %2039 = vmatmul.f32.gmra.mxu0 %v776
        %v2040 = vpop.f32.mrf.mxu0
        %2041 = vmatmul.f32.gmra.mxu0 %v779
        %v2042 = vpop.f32.mrf.mxu0
        %2043 = vmatmul.f32.gmra.mxu0 %v782
        %v2044 = vpop.f32.mrf.mxu0
        %2045 = vmatmul.f32.gmra.mxu0 %v785
        %v2046 = vpop.f32.mrf.mxu0
        %2047 = vdwg.mxu0
        %2048 = vmatpush.xpose.msra.mxu0 %v1950
        %2049 = vmatpush.xpose.msra.mxu0 %v1949
        %2050 = vmatpush.xpose.msra.mxu0 %v1948
        %2051 = vmatpush.xpose.msra.mxu0 %v1947
        %2052 = vmatpush.xpose.msra.mxu0 %v1946
        %2053 = vmatpush.xpose.msra.mxu0 %v1945
        %2054 = vmatpush.xpose.msra.mxu0 %v1944
        %2055 = vmatpush.xpose.msra.mxu0 %v1943
        %2056 = vmatpush.xpose.msra.mxu0 %v1942
        %2057 = vmatpush.xpose.msra.mxu0 %v1941
        %2058 = vmatpush.xpose.msra.mxu0 %v1940
        %2059 = vmatpush.xpose.msra.mxu0 %v1939
        %2060 = vmatpush.xpose.msra.mxu0 %v1938
        %2061 = vmatpush.xpose.msra.mxu0 %v1937
        %2062 = vmatpush.xpose.msra.mxu0 %v1936
        %2063 = vmatpush.xpose.msra.mxu0 %v1935
        %2064 = vmatmul.f32.gmra.mxu0 %v579
        %v2065 = vpop.f32.mrf.mxu0
        %2066 = vmatmul.f32.gmra.mxu0 %v582
        %v2067 = vpop.f32.mrf.mxu0
        %2068 = vmatmul.f32.gmra.mxu0 %v585
        %v2069 = vpop.f32.mrf.mxu0
        %2070 = vmatmul.f32.gmra.mxu0 %v588
        %v2071 = vpop.f32.mrf.mxu0
        %2072 = vmatmul.f32.gmra.mxu0 %v591
        %v2073 = vpop.f32.mrf.mxu0
        %2074 = vmatmul.f32.gmra.mxu0 %v594
        %v2075 = vpop.f32.mrf.mxu0
        %2076 = vmatmul.f32.gmra.mxu0 %v597
        %v2077 = vpop.f32.mrf.mxu0
        %2078 = vmatmul.f32.gmra.mxu0 %v600
        %v2079 = vpop.f32.mrf.mxu0
        %2080 = vmatmul.f32.gmra.mxu0 %v603
        %v2081 = vpop.f32.mrf.mxu0
        %2082 = vmatmul.f32.gmra.mxu0 %v606
        %v2083 = vpop.f32.mrf.mxu0
        %2084 = vmatmul.f32.gmra.mxu0 %v609
        %v2085 = vpop.f32.mrf.mxu0
        %2086 = vmatmul.f32.gmra.mxu0 %v612
        %v2087 = vpop.f32.mrf.mxu0
        %2088 = vmatmul.f32.gmra.mxu0 %v615
        %v2089 = vpop.f32.mrf.mxu0
        %2090 = vmatmul.f32.gmra.mxu0 %v618
        %v2091 = vpop.f32.mrf.mxu0
        %2092 = vmatmul.f32.gmra.mxu0 %v621
        %v2093 = vpop.f32.mrf.mxu0
        %2094 = vmatmul.f32.gmra.mxu0 %v624
        %v2095 = vpop.f32.mrf.mxu0
        %2096 = vmatmul.f32.gmra.mxu0 %v740
        %v2097 = vpop.f32.mrf.mxu0
        %v2098 = vadd.f32 0.0, %v2097
        %2099 = vmatmul.f32.gmra.mxu0 %v743
        %v2100 = vpop.f32.mrf.mxu0
        %v2101 = vadd.f32 0.0, %v2100
        %2102 = vmatmul.f32.gmra.mxu0 %v746
        %v2103 = vpop.f32.mrf.mxu0
        %v2104 = vadd.f32 0.0, %v2103
        %2105 = vmatmul.f32.gmra.mxu0 %v749
        %v2106 = vpop.f32.mrf.mxu0
        %v2107 = vadd.f32 0.0, %v2106
        %2108 = vmatmul.f32.gmra.mxu0 %v752
        %v2109 = vpop.f32.mrf.mxu0
        %v2110 = vadd.f32 0.0, %v2109
        %2111 = vmatmul.f32.gmra.mxu0 %v755
        %v2112 = vpop.f32.mrf.mxu0
        %v2113 = vadd.f32 0.0, %v2112
        %2114 = vmatmul.f32.gmra.mxu0 %v758
        %v2115 = vpop.f32.mrf.mxu0
        %v2116 = vadd.f32 0.0, %v2115
        %2117 = vmatmul.f32.gmra.mxu0 %v761
        %v2118 = vpop.f32.mrf.mxu0
        %v2119 = vadd.f32 0.0, %v2118
        %2120 = vmatmul.f32.gmra.mxu0 %v764
        %v2121 = vpop.f32.mrf.mxu0
        %v2122 = vadd.f32 0.0, %v2121
        %2123 = vmatmul.f32.gmra.mxu0 %v767
        %v2124 = vpop.f32.mrf.mxu0
        %v2125 = vadd.f32 0.0, %v2124
        %2126 = vmatmul.f32.gmra.mxu0 %v770
        %v2127 = vpop.f32.mrf.mxu0
        %v2128 = vadd.f32 0.0, %v2127
        %2129 = vmatmul.f32.gmra.mxu0 %v773
        %v2130 = vpop.f32.mrf.mxu0
        %v2131 = vadd.f32 0.0, %v2130
        %2132 = vmatmul.f32.gmra.mxu0 %v776
        %v2133 = vpop.f32.mrf.mxu0
        %v2134 = vadd.f32 0.0, %v2133
        %2135 = vmatmul.f32.gmra.mxu0 %v779
        %v2136 = vpop.f32.mrf.mxu0
        %v2137 = vadd.f32 0.0, %v2136
        %2138 = vmatmul.f32.gmra.mxu0 %v782
        %v2139 = vpop.f32.mrf.mxu0
        %v2140 = vadd.f32 0.0, %v2139
        %2141 = vmatmul.f32.gmra.mxu0 %v785
        %v2142 = vpop.f32.mrf.mxu0
        %v2143 = vadd.f32 0.0, %v2142
        %2144 = vdwg.mxu0
        %v2145 = vmul.f32 %v1969, %v1203
        %v2146 = vmul.f32 %v1972, %v1204
        %v2147 = vmul.f32 %v1975, %v1205
        %v2148 = vmul.f32 %v1978, %v1206
        %v2149 = vmul.f32 %v1981, %v1207
        %v2150 = vmul.f32 %v1984, %v1208
        %v2151 = vmul.f32 %v1987, %v1209
        %v2152 = vmul.f32 %v1990, %v1210
        %v2153 = vmul.f32 %v1993, %v1211
        %v2154 = vmul.f32 %v1996, %v1212
        %v2155 = vmul.f32 %v1999, %v1213
        %v2156 = vmul.f32 %v2002, %v1214
        %v2157 = vmul.f32 %v2005, %v1215
        %v2158 = vmul.f32 %v2008, %v1216
        %v2159 = vmul.f32 %v2011, %v1217
        %v2160 = vmul.f32 %v2014, %v1218
        %v2161 = vmul.f32 %v2098, %v1219
        %v2162 = vmul.f32 %v2101, %v1220
        %v2163 = vmul.f32 %v2104, %v1221
        %v2164 = vmul.f32 %v2107, %v1222
        %v2165 = vmul.f32 %v2110, %v1223
        %v2166 = vmul.f32 %v2113, %v1224
        %v2167 = vmul.f32 %v2116, %v1225
        %v2168 = vmul.f32 %v2119, %v1226
        %v2169 = vmul.f32 %v2122, %v1227
        %v2170 = vmul.f32 %v2125, %v1228
        %v2171 = vmul.f32 %v2128, %v1229
        %v2172 = vmul.f32 %v2131, %v1230
        %v2173 = vmul.f32 %v2134, %v1231
        %v2174 = vmul.f32 %v2137, %v1232
        %v2175 = vmul.f32 %v2140, %v1233
        %v2176 = vmul.f32 %v2143, %v1234
        %2177 = vmatpush.msra.mxu0 %v1201
        %2178 = vmatpush.msra.mxu0 %v1199
        %2179 = vmatpush.msra.mxu0 %v1197
        %2180 = vmatpush.msra.mxu0 %v1195
        %2181 = vmatpush.msra.mxu0 %v1193
        %2182 = vmatpush.msra.mxu0 %v1191
        %2183 = vmatpush.msra.mxu0 %v1189
        %2184 = vmatpush.msra.mxu0 %v1187
        %2185 = vmatpush.msra.mxu0 %v1185
        %2186 = vmatpush.msra.mxu0 %v1183
        %2187 = vmatpush.msra.mxu0 %v1181
        %2188 = vmatpush.msra.mxu0 %v1179
        %2189 = vmatpush.msra.mxu0 %v1177
        %2190 = vmatpush.msra.mxu0 %v1175
        %2191 = vmatpush.msra.mxu0 %v1173
        %2192 = vmatpush.msra.mxu0 %v1171
        %2193 = vmatmul.f32.gmra.mxu0 %v2145
        %v2194 = vpop.f32.mrf.mxu0
        %v2195 = vadd.f32 0.0, %v2194
        %2196 = vmatmul.f32.gmra.mxu0 %v2146
        %v2197 = vpop.f32.mrf.mxu0
        %v2198 = vadd.f32 0.0, %v2197
        %2199 = vmatmul.f32.gmra.mxu0 %v2147
        %v2200 = vpop.f32.mrf.mxu0
        %v2201 = vadd.f32 0.0, %v2200
        %2202 = vmatmul.f32.gmra.mxu0 %v2148
        %v2203 = vpop.f32.mrf.mxu0
        %v2204 = vadd.f32 0.0, %v2203
        %2205 = vmatmul.f32.gmra.mxu0 %v2149
        %v2206 = vpop.f32.mrf.mxu0
        %v2207 = vadd.f32 0.0, %v2206
        %2208 = vmatmul.f32.gmra.mxu0 %v2150
        %v2209 = vpop.f32.mrf.mxu0
        %v2210 = vadd.f32 0.0, %v2209
        %2211 = vmatmul.f32.gmra.mxu0 %v2151
        %v2212 = vpop.f32.mrf.mxu0
        %v2213 = vadd.f32 0.0, %v2212
        %2214 = vmatmul.f32.gmra.mxu0 %v2152
        %v2215 = vpop.f32.mrf.mxu0
        %v2216 = vadd.f32 0.0, %v2215
        %2217 = vmatmul.f32.gmra.mxu0 %v2153
        %v2218 = vpop.f32.mrf.mxu0
        %v2219 = vadd.f32 0.0, %v2218
        %2220 = vmatmul.f32.gmra.mxu0 %v2154
        %v2221 = vpop.f32.mrf.mxu0
        %v2222 = vadd.f32 0.0, %v2221
        %2223 = vmatmul.f32.gmra.mxu0 %v2155
        %v2224 = vpop.f32.mrf.mxu0
        %v2225 = vadd.f32 0.0, %v2224
        %2226 = vmatmul.f32.gmra.mxu0 %v2156
        %v2227 = vpop.f32.mrf.mxu0
        %v2228 = vadd.f32 0.0, %v2227
        %2229 = vmatmul.f32.gmra.mxu0 %v2157
        %v2230 = vpop.f32.mrf.mxu0
        %v2231 = vadd.f32 0.0, %v2230
        %2232 = vmatmul.f32.gmra.mxu0 %v2158
        %v2233 = vpop.f32.mrf.mxu0
        %v2234 = vadd.f32 0.0, %v2233
        %2235 = vmatmul.f32.gmra.mxu0 %v2159
        %v2236 = vpop.f32.mrf.mxu0
        %v2237 = vadd.f32 0.0, %v2236
        %2238 = vmatmul.f32.gmra.mxu0 %v2160
        %v2239 = vpop.f32.mrf.mxu0
        %v2240 = vadd.f32 0.0, %v2239
        %2241 = vdwg.mxu0
        %2243 = vset.pattern.permute.xlu0 0
        %2244 = vperm.xlu0 %2243, %v1239
        %v2245 = vpop.permute.xlu0 %2244
        %2248 = vset.pattern.permute.xlu0 0
        %2249 = vperm.xlu0 %2248, %v1240
        %v2250 = vpop.permute.xlu0 %2249
        %2253 = vset.pattern.permute.xlu0 0
        %2254 = vperm.xlu0 %2253, %v1241
        %v2255 = vpop.permute.xlu0 %2254
        %2258 = vset.pattern.permute.xlu0 0
        %2259 = vperm.xlu0 %2258, %v1242
        %v2260 = vpop.permute.xlu0 %2259
        %2262 = vmatpush.msra.mxu0 %v2240
        %2263 = vmatpush.msra.mxu0 %v2237
        %2264 = vmatpush.msra.mxu0 %v2234
        %2265 = vmatpush.msra.mxu0 %v2231
        %2266 = vmatpush.msra.mxu0 %v2228
        %2267 = vmatpush.msra.mxu0 %v2225
        %2268 = vmatpush.msra.mxu0 %v2222
        %2269 = vmatpush.msra.mxu0 %v2219
        %2270 = vmatpush.msra.mxu0 %v2216
        %2271 = vmatpush.msra.mxu0 %v2213
        %2272 = vmatpush.msra.mxu0 %v2210
        %2273 = vmatpush.msra.mxu0 %v2207
        %2274 = vmatpush.msra.mxu0 %v2204
        %2275 = vmatpush.msra.mxu0 %v2201
        %2276 = vmatpush.msra.mxu0 %v2198
        %2277 = vmatpush.msra.mxu0 %v2195
        %2278 = vmatmul.f32.gmra.mxu0 %v1235
        %v2279 = vpop.f32.mrf.mxu0
        %v2280 = vadd.f32 %v2245, %v2279
        %2281 = vmatmul.f32.gmra.mxu0 %v1236
        %v2282 = vpop.f32.mrf.mxu0
        %v2283 = vadd.f32 %v2250, %v2282
        %2284 = vmatmul.f32.gmra.mxu0 %v1237
        %v2285 = vpop.f32.mrf.mxu0
        %v2286 = vadd.f32 %v2255, %v2285
        %2287 = vmatmul.f32.gmra.mxu0 %v1238
        %v2288 = vpop.f32.mrf.mxu0
        %v2289 = vadd.f32 %v2260, %v2288
        %2290 = vdwg.mxu0
        %v2291 = vmul.f32 %v2280, %v2280
        %v2292 = vmul.f32 %v2283, %v2283
        %v2293 = vmul.f32 %v2286, %v2286
        %v2294 = vmul.f32 %v2289, %v2289
        %v2295 = vadd.f32 %v2291, %v2292
        %v2296 = vadd.f32 %v2295, %v2293
        %v2297 = vadd.f32 %v2296, %v2294
        %v2298 = vrot.slane %v2297, 4
        %v2299 = vadd.f32 %v2297, %v2298
        %v2300 = vrot.slane %v2299, 2
        %v2301 = vadd.f32 %v2299, %v2300
        %v2302 = vrot.slane %v2301, 1
        %v2303 = vadd.f32 %v2301, %v2302
        %v2304 = vmax.f32 %v2303, 1e-24
        %v2305 = vrsqrt.pop %v2304
        %v2306 = vmul.f32 %v2305, %v2304
        %v2307 = vmul.f32 %v2306, %v2305
        %v2308 = vmul.f32 0.5, %v2307
        %v2309 = vsub.f32 1.5, %v2308
        %v2310 = vmul.f32 %v2305, %v2309
        %vm2311 = vweird.f32 %v2304
        %vm2312 = vweird.f32 %v2305
        %vm2313 = vmor %vm2311, %vm2312
        %v2314 = vsel %vm2313, %v2305, %v2310
        %v2315 = vmul.f32 %v2280, %v2314
        %v2316 = vmul.f32 %v2283, %v2314
        %v2317 = vmul.f32 %v2286, %v2314
        %v2318 = vmul.f32 %v2289, %v2314
        %2320 = vset.pattern.permute.xlu0 1
        %2321 = vperm.xlu0 %2320, %v1243
        %v2322 = vpop.permute.xlu0 %2321
        %2325 = vset.pattern.permute.xlu0 1
        %2326 = vperm.xlu0 %2325, %v1244
        %v2327 = vpop.permute.xlu0 %2326
        %2330 = vset.pattern.permute.xlu0 1
        %2331 = vperm.xlu0 %2330, %v1245
        %v2332 = vpop.permute.xlu0 %2331
        %2335 = vset.pattern.permute.xlu0 1
        %2336 = vperm.xlu0 %2335, %v1246
        %v2337 = vpop.permute.xlu0 %2336
        %v2339 = vmul.f32 %v2315, %v2322
        %v2340 = vmul.f32 %v2316, %v2327
        %v2341 = vmul.f32 %v2317, %v2332
        %v2342 = vmul.f32 %v2318, %v2337
        %2343 = vst [vmem:[%s261] sm:$0xff] %v2339
        %2344 = vst [vmem:[%s261 + $0x10] sm:$0xff] %v2340
        %2345 = vst [vmem:[%s261 + $0x20] sm:$0xff] %v2341
        %2346 = vst [vmem:[%s261 + $0x30] sm:$0xff] %v2342
        %2347 = vmatpush.msra.mxu0 %v1202
        %2348 = vmatpush.msra.mxu0 %v1200
        %2349 = vmatpush.msra.mxu0 %v1198
        %2350 = vmatpush.msra.mxu0 %v1196
        %2351 = vmatpush.msra.mxu0 %v1194
        %2352 = vmatpush.msra.mxu0 %v1192
        %2353 = vmatpush.msra.mxu0 %v1190
        %2354 = vmatpush.msra.mxu0 %v1188
        %2355 = vmatpush.msra.mxu0 %v1186
        %2356 = vmatpush.msra.mxu0 %v1184
        %2357 = vmatpush.msra.mxu0 %v1182
        %2358 = vmatpush.msra.mxu0 %v1180
        %2359 = vmatpush.msra.mxu0 %v1178
        %2360 = vmatpush.msra.mxu0 %v1176
        %2361 = vmatpush.msra.mxu0 %v1174
        %2362 = vmatpush.msra.mxu0 %v1172
        %2363 = vmatmul.f32.gmra.mxu0 %v2161
        %v2364 = vpop.f32.mrf.mxu0
        %v2365 = vadd.f32 0.0, %v2364
        %2366 = vmatmul.f32.gmra.mxu0 %v2162
        %v2367 = vpop.f32.mrf.mxu0
        %v2368 = vadd.f32 0.0, %v2367
        %2369 = vmatmul.f32.gmra.mxu0 %v2163
        %v2370 = vpop.f32.mrf.mxu0
        %v2371 = vadd.f32 0.0, %v2370
        %2372 = vmatmul.f32.gmra.mxu0 %v2164
        %v2373 = vpop.f32.mrf.mxu0
        %v2374 = vadd.f32 0.0, %v2373
        %2375 = vmatmul.f32.gmra.mxu0 %v2165
        %v2376 = vpop.f32.mrf.mxu0
        %v2377 = vadd.f32 0.0, %v2376
        %2378 = vmatmul.f32.gmra.mxu0 %v2166
        %v2379 = vpop.f32.mrf.mxu0
        %v2380 = vadd.f32 0.0, %v2379
        %2381 = vmatmul.f32.gmra.mxu0 %v2167
        %v2382 = vpop.f32.mrf.mxu0
        %v2383 = vadd.f32 0.0, %v2382
        %2384 = vmatmul.f32.gmra.mxu0 %v2168
        %v2385 = vpop.f32.mrf.mxu0
        %v2386 = vadd.f32 0.0, %v2385
        %2387 = vmatmul.f32.gmra.mxu0 %v2169
        %v2388 = vpop.f32.mrf.mxu0
        %v2389 = vadd.f32 0.0, %v2388
        %2390 = vmatmul.f32.gmra.mxu0 %v2170
        %v2391 = vpop.f32.mrf.mxu0
        %v2392 = vadd.f32 0.0, %v2391
        %2393 = vmatmul.f32.gmra.mxu0 %v2171
        %v2394 = vpop.f32.mrf.mxu0
        %v2395 = vadd.f32 0.0, %v2394
        %2396 = vmatmul.f32.gmra.mxu0 %v2172
        %v2397 = vpop.f32.mrf.mxu0
        %v2398 = vadd.f32 0.0, %v2397
        %2399 = vmatmul.f32.gmra.mxu0 %v2173
        %v2400 = vpop.f32.mrf.mxu0
        %v2401 = vadd.f32 0.0, %v2400
        %2402 = vmatmul.f32.gmra.mxu0 %v2174
        %v2403 = vpop.f32.mrf.mxu0
        %v2404 = vadd.f32 0.0, %v2403
        %2405 = vmatmul.f32.gmra.mxu0 %v2175
        %v2406 = vpop.f32.mrf.mxu0
        %v2407 = vadd.f32 0.0, %v2406
        %2408 = vmatmul.f32.gmra.mxu0 %v2176
        %v2409 = vpop.f32.mrf.mxu0
        %v2410 = vadd.f32 0.0, %v2409
        %2411 = vdwg.mxu0
        %2412 = vmatpush.msra.mxu0 %v2410
        %2413 = vmatpush.msra.mxu0 %v2407
        %2414 = vmatpush.msra.mxu0 %v2404
        %2415 = vmatpush.msra.mxu0 %v2401
        %2416 = vmatpush.msra.mxu0 %v2398
        %2417 = vmatpush.msra.mxu0 %v2395
        %2418 = vmatpush.msra.mxu0 %v2392
        %2419 = vmatpush.msra.mxu0 %v2389
        %2420 = vmatpush.msra.mxu0 %v2386
        %2421 = vmatpush.msra.mxu0 %v2383
        %2422 = vmatpush.msra.mxu0 %v2380
        %2423 = vmatpush.msra.mxu0 %v2377
        %2424 = vmatpush.msra.mxu0 %v2374
        %2425 = vmatpush.msra.mxu0 %v2371
        %2426 = vmatpush.msra.mxu0 %v2368
        %2427 = vmatpush.msra.mxu0 %v2365
        %2428 = vmatmul.f32.gmra.mxu0 %v1235
        %v2429 = vpop.f32.mrf.mxu0
        %v2430 = vadd.f32 %v2245, %v2429
        %2431 = vmatmul.f32.gmra.mxu0 %v1236
        %v2432 = vpop.f32.mrf.mxu0
        %v2433 = vadd.f32 %v2250, %v2432
        %2434 = vmatmul.f32.gmra.mxu0 %v1237
        %v2435 = vpop.f32.mrf.mxu0
        %v2436 = vadd.f32 %v2255, %v2435
        %2437 = vmatmul.f32.gmra.mxu0 %v1238
        %v2438 = vpop.f32.mrf.mxu0
        %v2439 = vadd.f32 %v2260, %v2438
        %2440 = vdwg.mxu0
        %v2441 = vmul.f32 %v2430, %v2430
        %v2442 = vmul.f32 %v2433, %v2433
        %v2443 = vmul.f32 %v2436, %v2436
        %v2444 = vmul.f32 %v2439, %v2439
        %v2445 = vadd.f32 %v2441, %v2442
        %v2446 = vadd.f32 %v2445, %v2443
        %v2447 = vadd.f32 %v2446, %v2444
        %v2448 = vrot.slane %v2447, 4
        %v2449 = vadd.f32 %v2447, %v2448
        %v2450 = vrot.slane %v2449, 2
        %v2451 = vadd.f32 %v2449, %v2450
        %v2452 = vrot.slane %v2451, 1
        %v2453 = vadd.f32 %v2451, %v2452
        %v2454 = vmax.f32 %v2453, 1e-24
        %v2455 = vrsqrt.pop %v2454
        %v2456 = vmul.f32 %v2455, %v2454
        %v2457 = vmul.f32 %v2456, %v2455
        %v2458 = vmul.f32 0.5, %v2457
        %v2459 = vsub.f32 1.5, %v2458
        %v2460 = vmul.f32 %v2455, %v2459
        %vm2461 = vweird.f32 %v2454
        %vm2462 = vweird.f32 %v2455
        %vm2463 = vmor %vm2461, %vm2462
        %v2464 = vsel %vm2463, %v2455, %v2460
        %v2465 = vmul.f32 %v2430, %v2464
        %v2466 = vmul.f32 %v2433, %v2464
        %v2467 = vmul.f32 %v2436, %v2464
        %v2468 = vmul.f32 %v2439, %v2464
        %v2469 = vmul.f32 %v2465, %v2322
        %v2470 = vmul.f32 %v2466, %v2327
        %v2471 = vmul.f32 %v2467, %v2332
        %v2472 = vmul.f32 %v2468, %v2337
        %2473 = vst [vmem:[%s261 + $0x8] sm:$0xff] %v2469
        %2474 = vst [vmem:[%s261 + $0x18] sm:$0xff] %v2470
        %2475 = vst [vmem:[%s261 + $0x28] sm:$0xff] %v2471
        %2476 = vst [vmem:[%s261 + $0x38] sm:$0xff] %v2472
        %s2477 = sand.u32 %s141, 1
        %s2478 = scalar_lea.sflag [#allocation4], %s2477
        %s2479 = sand.u32 %s141, 1
        %s2480 = smul.addr %s2479, 64
        %s2481 = scalar_lea.vmem [#allocation7], %s2480
        // Predicated region
        $region49: #{tpu_custom_call.1} parent=39 // pred_check
          %p2482 = pneg %p151
        $region50: #{tpu_custom_call.1} parent=39 // pred_check_branch
          %2484 = sbr.rel (%p2482) target = $region52
        $region51: #{tpu_custom_call.1} parent=39 // pred_region
          %s2485 = smul.u32 2, %s23
          %2487 = vsyncadd %s2478, 0
          %s2488 = smul.addr %s2485, 8
          %s2489 = scalar_lea.hbm %s5, %s2488
          %s2490 = sshll.u32 %s2481, 4
          %s2491 = int_to_ptr.vmem [resolvable:$true] %s2490
          %s2492 = sshll.u32 %s2489, 4
          %s2493 = int_to_ptr.hbm [resolvable:$true] %s2492
          %2498 = dma.vmem_to_hbm [thread:$0]  %s2491, 1024, %s2493, %s2478, 256, 512, 16
        $region52: #{tpu_custom_call.1} parent=39 // pred_fallthru
          _
      $region40: #{tpu_custom_call.1} parent=5 // pred_fallthru
        _
      %p2499 = scmp.le.s32.totalorder 2, %s18
      // Predicated region
      $region53: #{tpu_custom_call.1} parent=5 // pred_check
        %p2500 = pneg %p2499
      $region54: #{tpu_custom_call.1} parent=5 // pred_check_branch
        %2502 = sbr.rel (%p2500) target = $region56
      $region55: #{tpu_custom_call.1} parent=5 // pred_region
        %s2503 = ssub.s32 %s18, 2
        // Predicated region
        $region57: #{tpu_custom_call.1} parent=55 // pred_check
          %p2504 = pneg %p157
        $region58: #{tpu_custom_call.1} parent=55 // pred_check_branch
          %2506 = sbr.rel (%p2504) target = $region60
        $region59: #{tpu_custom_call.1} parent=55 // pred_region
          %s2507 = sand.u32 %s142, 1
          %s2508 = scalar_lea.sflag [#allocation4], %s2507
          %s2509 = sand.u32 %s142, 1
          %s2510 = smul.addr %s2509, 64
          %s2511 = scalar_lea.vmem [#allocation7], %s2510
          %2513 = dma.done %s2508, 1024
        $region60: #{tpu_custom_call.1} parent=55 // pred_fallthru
          _
      $region56: #{tpu_custom_call.1} parent=5 // pred_fallthru
        _
    $region6: #{tpu_custom_call.1} parent=1 // loop_footer
      %s22 = sadd.s32 1, %s18
    $region7: #{tpu_custom_call.1} parent=1 // loop_footer_branch
      %17 = sbr.rel target = $region3
    $region8: #{tpu_custom_call.1} parent=1 // loop_exit
      _
    %2514 = vsyncpa [#allocation3], 1
    %s2515 = scalar_lea.sflag [#allocation3], 1
    %2516 = vsyncpa %s2515, 1
    %2517 = vsyncpa [#allocation6], 1
    %2518 = vsyncpa [#allocation4], 1
    %s2519 = scalar_lea.sflag [#allocation4], 1
    %2520 = vsyncpa %s2519, 1

</llo_original>
